<compile_context>
chip_gen: v6e
topology: v6e:2x2x1
jax: 0.10.0
libtpu: 0.0.40
codegen_flags: <defaults>
</compile_context>

<pallas_src>
import jax
import jax.numpy as jnp
from jax.experimental import pallas as pl
from jax.experimental.pallas import tpu as pltpu

# ----------------------- small config (consistent with NeRFPPMLP) -----------
MIN_DEG_POINT = 0
MAX_DEG_POINT = 2
DEG_VIEW = 2
INPUT_CH = 3
INPUT_CH_VIEW = 3
NETDEPTH = 4
NETWIDTH = 32            # torch default 128, shrunk for the test
NETDEPTH_COND = 2
NETWIDTH_COND = 16       # torch default 64, shrunk
SKIP_LAYER = 2
COMBINE_LAYER = 3
NUM_RGB = 3
NUM_DENSITY = 1
LOCAL_LATENT = 32        # torch default 512, shrunk
WORLD_LATENT = 16        # torch default 128, shrunk
NUM_SRC_VIEWS = 3
COMBINE_TYPE = "average"

PE_SIZE = ((MAX_DEG_POINT - MIN_DEG_POINT) * 2 + 1) * INPUT_CH          # 15
POS_SIZE = PE_SIZE + LOCAL_LATENT + WORLD_LATENT                        # 63
VIEW_POS_SIZE = (DEG_VIEW * 2 + 1) * INPUT_CH_VIEW                      # 15
N_OUT = NUM_DENSITY + NUM_RGB                                           # 4


# ------------------------------- fused kernel --------------------------------
def _fused_kernel(inp_ref, cond_ref, w0_ref, w3b_ref, wp_ref,
                  wv0a_ref, wv0b_ref, wv1_ref, wd4_ref, wr4_ref, bias_ref,
                  out_ref):
    """Trunk MLP + bottleneck + views_linear[0] + source-view mean + merged
    heads for one row tile of `tm` combined points (V source-view rows each)."""
    V, TM, P = inp_ref.shape
    VP = cond_ref.shape[2]
    H = w0_ref.shape[1]
    HC = wv1_ref.shape[0]
    n_out = wd4_ref.shape[1]
    cdt = w0_ref.dtype                       # MXU operand dtype (f32 or bf16)

    def dot(a, w):
        return jnp.dot(a.astype(cdt), w, preferred_element_type=jnp.float32)

    # (V, TM, F) -> (V*TM, F): TM is a multiple of 8, so this flatten is a
    # layout-trivial merge of leading dims; one big matmul per layer instead
    # of V small ones.
    inp = inp_ref[...].reshape(V * TM, P)
    cond = cond_ref[...].reshape(V * TM, VP)

    wp = wp_ref[...]                         # packed [W1; W2; W3a; Wb]  (4H, H)
    w1 = wp[0 * H:1 * H, :]
    w2 = wp[1 * H:2 * H, :]
    w3a = wp[2 * H:3 * H, :]
    wb = wp[3 * H:4 * H, :]

    b = bias_ref[...]                        # (8, BW) float32
    b0 = b[0:1, :H]
    b1 = b[1:2, :H]
    b2 = b[2:3, :H]
    b3 = b[3:4, :H]
    bb = b[4:5, :H]
    bv0 = b[5:6, :HC]
    bv1 = b[6:7, :HC]
    bh = b[7:8, :n_out]                      # [bd | br]

    # ---- pts MLP (per source-view row), bias/ReLU in f32 -------------------
    h = jnp.maximum(dot(inp, w0_ref[...]) + b0, 0.0)
    h = jnp.maximum(dot(h, w1) + b1, 0.0)
    h = jnp.maximum(dot(h, w2) + b2, 0.0)
    # skip connection: cat([h, inputs]) @ W3 == h @ W3[:H] + inputs @ W3[H:]
    h3 = jnp.maximum(dot(h, w3a) + dot(inp, w3b_ref[...]) + b3, 0.0)   # (V*TM, H)
    bneck = dot(h3, wb) + bb                                           # (V*TM, H)
    # views_linear[0] on cat([bottleneck, condition]) -> exact split matmul
    v0 = dot(bneck, wv0a_ref[...]) + dot(cond, wv0b_ref[...]) + bv0    # (V*TM, HC)

    # ---- combine_interleaved ("average" over V source views), in-VMEM ------
    x_c = h3[0:TM, :]
    v_c = v0[0:TM, :]
    for vi in range(1, V):                   # static unroll, V is tiny
        x_c = x_c + h3[vi * TM:(vi + 1) * TM, :]
        v_c = v_c + v0[vi * TM:(vi + 1) * TM, :]
    inv_v = 1.0 / V
    x_c = x_c * inv_v
    v_c = v_c * inv_v

    # ---- heads on combined rows --------------------------------------------
    v = jnp.maximum(v_c, 0.0)                # relu AFTER combine (matches torch)
    v = jnp.maximum(dot(v, wv1_ref[...]) + bv1, 0.0)
    # merged heads: out[:, 0] = density, out[:, 1:4] = rgb
    out = dot(x_c, wd4_ref[...]) + dot(v, wr4_ref[...]) + bh           # (TM, 4)
    out_ref[...] = out.astype(out_ref.dtype)


# ------------------------------ helpers / wrapper -----------------------------
def _round_up(x, m):
    return ((x + m - 1) // m) * m


def _to_view_major(t, sb, v, k):
    """(SB*V*K, F) row-major (sb, v, k) -> (V, SB*K, F) with views leading."""
    f = t.shape[-1]
    return t.reshape(sb, v, k, f).transpose(1, 0, 2, 3).reshape(v, sb * k, f)


def nerfpp_mlp_forward(params, x, condition_tile, world_latent, local_latent,
                       combine_inner_dims, *, tile_rows=512,
                       compute_dtype=jnp.float32):
    """Matches NeRFPPMLP.forward(..., out_nocs=False); returns (raw_rgb, raw_density)."""
    num_samples, feat_dim = x.shape[1:]
    xf = x.reshape(-1, feat_dim)
    inputs = jnp.concatenate([xf, local_latent, world_latent], axis=-1)   # (N, P)
    N, P = inputs.shape
    VP = condition_tile.shape[1]
    H, HC = NETWIDTH, NETWIDTH_COND

    if len(combine_inner_dims) == 1 and combine_inner_dims[0] == 1:
        V, K, SB = 1, N, 1
    else:
        V, K = combine_inner_dims
        SB = N // (V * K)
    M = SB * K                                   # combined row count

    # reorder rows so each combined point's V source-view rows line up on a
    # leading axis -> the mean is a cheap in-register reduce inside the kernel.
    inp_vm = _to_view_major(inputs, SB, V, K)             # (V, M, P)
    cond_vm = _to_view_major(condition_tile, SB, V, K)    # (V, M, VP)

    # row tile: as large as possible (cap keeps double-buffered tiles well
    # inside VMEM even at production widths / v7x's 64 MiB); grid=(1,) at toy
    # sizes. Non-divisible M is zero-padded and sliced after the call.
    tm = min(tile_rows, _round_up(M, 8))
    tm = max(8, (tm // 8) * 8)
    m_pad = _round_up(M, tm)
    if m_pad != M:
        inp_vm = jnp.pad(inp_vm, ((0, 0), (0, m_pad - M), (0, 0)))
        cond_vm = jnp.pad(cond_vm, ((0, 0), (0, m_pad - M), (0, 0)))

    cdt = compute_dtype
    inp_vm = inp_vm.astype(cdt)
    cond_vm = cond_vm.astype(cdt)

    # split / packed weights (layer-3 skip and views_linear[0] concat as split
    # matmuls; the four HxH weights packed into one operand).
    w3a, w3b = params["W3"][:H], params["W3"][H:]
    wv0a, wv0b = params["Wv0"][:H], params["Wv0"][H:]
    wp = jnp.concatenate([params["W1"], params["W2"], w3a, params["Wb"]],
                         axis=0).astype(cdt)                       # (4H, H)
    w0 = params["W0"].astype(cdt)
    w3b = w3b.astype(cdt)
    wv0a = wv0a.astype(cdt)
    wv0b = wv0b.astype(cdt)
    wv1 = params["Wv1"].astype(cdt)
    # merged head weights: [Wd | 0] (H,4) and [0 | Wr] (HC,4)
    wd4 = jnp.pad(params["Wd"], ((0, 0), (0, NUM_RGB))).astype(cdt)
    wr4 = jnp.pad(params["Wr"], ((0, 0), (NUM_DENSITY, 0))).astype(cdt)

    BW = max(H, HC, N_OUT)
    pad_b = lambda bias: jnp.pad(bias, ((0, 0), (0, BW - bias.shape[1])))
    bias_pack = jnp.concatenate(
        [pad_b(params["b0"]), pad_b(params["b1"]), pad_b(params["b2"]),
         pad_b(params["b3"]), pad_b(params["bb"]),
         pad_b(params["bv0"]), pad_b(params["bv1"]),
         pad_b(jnp.concatenate([params["bd"], params["br"]], axis=1))],
        axis=0).astype(jnp.float32)                                # (8, BW)

    row_spec = lambda f: pl.BlockSpec((V, tm, f), lambda i: (0, i, 0))
    full2d = lambda shp: pl.BlockSpec(shp, lambda i: (0, 0))

    out = pl.pallas_call(
        _fused_kernel,
        grid=(m_pad // tm,),
        in_specs=[
            row_spec(P), row_spec(VP),
            full2d(w0.shape), full2d(w3b.shape), full2d(wp.shape),
            full2d(wv0a.shape), full2d(wv0b.shape), full2d(wv1.shape),
            full2d(wd4.shape), full2d(wr4.shape), full2d(bias_pack.shape),
        ],
        out_specs=pl.BlockSpec((tm, N_OUT), lambda i: (i, 0)),
        out_shape=jax.ShapeDtypeStruct((m_pad, N_OUT), jnp.float32),
        compiler_params=pltpu.CompilerParams(dimension_semantics=("parallel",)),
    )(inp_vm, cond_vm, w0, w3b, wp, wv0a, wv0b, wv1, wd4, wr4, bias_pack)

    out = out[:M]
    raw_density = out[:, :NUM_DENSITY].reshape(-1, num_samples, NUM_DENSITY)
    raw_rgb = out[:, NUM_DENSITY:].reshape(-1, num_samples, NUM_RGB)
    return raw_rgb, raw_density


# --------------------------- combine_interleaved (ref) ------------------------
def combine_interleaved(t, inner_dims, agg_type="average"):
    if len(inner_dims) == 1 and inner_dims[0] == 1:
        return t
    t = t.reshape((-1,) + tuple(inner_dims) + t.shape[1:])
    if agg_type == "average":
        t = jnp.mean(t, axis=1)
    elif agg_type == "max":
        t = jnp.max(t, axis=1)
    else:
        raise NotImplementedError(agg_type)
    return t


# ----------------------------- pure-JAX reference ----------------------------
def _mm(a, w):
    # Full-f32 matmul for the reference, so the check is independent of the
    # backend's default f32 matmul precision mode.
    return jnp.dot(a, w, precision=jax.lax.Precision.HIGHEST)


def ref_forward(p, x, condition_tile, world_latent, local_latent, combine_inner_dims):
    num_samples, feat_dim = x.shape[1:]
    xf = x.reshape(-1, feat_dim)
    xf = jnp.concatenate([xf, local_latent, world_latent], axis=-1)
    inputs = xf
    pts_W = [p["W0"], p["W1"], p["W2"], p["W3"]]
    pts_b = [p["b0"], p["b1"], p["b2"], p["b3"]]
    h = xf
    bottleneck = None
    for idx in range(NETDEPTH):
        h = jnp.maximum(_mm(h, pts_W[idx]) + pts_b[idx], 0.0)
        if idx == COMBINE_LAYER:
            bottleneck = _mm(h, p["Wb"]) + p["bb"]
            h = combine_interleaved(h, combine_inner_dims, COMBINE_TYPE)
        if idx % SKIP_LAYER == 0 and idx > 0:
            h = jnp.concatenate([h, inputs], axis=-1)
    raw_density = (_mm(h, p["Wd"]) + p["bd"]).reshape(-1, num_samples, NUM_DENSITY)
    v = jnp.concatenate([bottleneck, condition_tile], axis=-1)
    views_W = [p["Wv0"], p["Wv1"]]
    views_b = [p["bv0"], p["bv1"]]
    for idx in range(NETDEPTH_COND):
        v = _mm(v, views_W[idx]) + views_b[idx]
        if idx == 0:
            v = combine_interleaved(v, combine_inner_dims, COMBINE_TYPE)
        v = jnp.maximum(v, 0.0)
    raw_rgb = (_mm(v, p["Wr"]) + p["br"]).reshape(-1, num_samples, NUM_RGB)
    return raw_rgb, raw_density


# ------------------------------- parameter init -------------------------------
def _xavier(key, fan_in, fan_out):
    bound = (6.0 / (fan_in + fan_out)) ** 0.5
    return jax.random.uniform(key, (fan_in, fan_out), jnp.float32, -bound, bound)


def _bias(key, fan_in, fan_out):
    bound = 1.0 / (fan_in ** 0.5)
    return jax.random.uniform(key, (1, fan_out), jnp.float32, -bound, bound)


def init_params(key):
    H, HC, P, VP = NETWIDTH, NETWIDTH_COND, POS_SIZE, VIEW_POS_SIZE
    ks = jax.random.split(key, 18)
    p = {}
    p["W0"], p["b0"] = _xavier(ks[0], P, H), _bias(ks[1], P, H)
    p["W1"], p["b1"] = _xavier(ks[2], H, H), _bias(ks[3], H, H)
    p["W2"], p["b2"] = _xavier(ks[4], H, H), _bias(ks[5], H, H)
    p["W3"], p["b3"] = _xavier(ks[6], H + P, H), _bias(ks[7], H + P, H)
    p["Wb"], p["bb"] = _xavier(ks[8], H, H), _bias(ks[9], H, H)
    p["Wd"], p["bd"] = _xavier(ks[10], H, NUM_DENSITY), _bias(ks[11], H, NUM_DENSITY)
    p["Wv0"], p["bv0"] = _xavier(ks[12], H + VP, HC), _bias(ks[13], H + VP, HC)
    p["Wv1"], p["bv1"] = _xavier(ks[14], HC, HC), _bias(ks[15], HC, HC)
    p["Wr"], p["br"] = _xavier(ks[16], HC, NUM_RGB), _bias(ks[17], HC, NUM_RGB)
    return p


# ------------------------------------ main ------------------------------------
if __name__ == "__main__":
    key = jax.random.PRNGKey(0)
    keys = jax.random.split(key, 5)

    # 1 object, 3 source views, 4 rays, 8 samples per ray
    SB, R, S = 1, 4, 8
    B_in = SB * NUM_SRC_VIEWS * R           # 12 "rays" seen by the MLP
    N = B_in * S                            # 96 flattened points

    x = jax.random.normal(keys[0], (B_in, S, PE_SIZE), jnp.float32)
    condition_tile = jax.random.normal(keys[1], (N, VIEW_POS_SIZE), jnp.float32)
    local_latent = jax.random.normal(keys[2], (N, LOCAL_LATENT), jnp.float32)
    world_latent = jax.random.normal(keys[3], (N, WORLD_LATENT), jnp.float32)
    params = init_params(keys[4])

    combine_inner_dims = (NUM_SRC_VIEWS, R * S)   # average over source views

    # f32 compute for a tight reference check; pass compute_dtype=jnp.bfloat16
    # on v6e/v7x for MXU-native operands (keeps f32 accumulation).
    raw_rgb, raw_density = nerfpp_mlp_forward(
        params, x, condition_tile, world_latent, local_latent, combine_inner_dims)
    jax.block_until_ready((raw_rgb, raw_density))

    rgb_ref, dens_ref = ref_forward(
        params, x, condition_tile, world_latent, local_latent, combine_inner_dims)

    assert raw_rgb.shape == rgb_ref.shape == (SB * R, S, NUM_RGB)
    assert raw_density.shape == dens_ref.shape == (SB * R, S, NUM_DENSITY)
    # small headroom for f32-matmul precision-mode differences between the
    # Pallas/MXU path and the XLA reference path.
    assert jnp.allclose(raw_rgb, rgb_ref, atol=2e-3, rtol=2e-3)
    assert jnp.allclose(raw_density, dens_ref, atol=2e-3, rtol=2e-3)

    print("KERNEL_OK")
</pallas_src>

<mosaic_0001>
module attributes {stable_mosaic.version = 11 : i64} {
  func.func @_fused_kernel(%arg0: i32, %arg1: memref<3x32x63xf32, #tpu.memory_space<vmem>>, %arg2: memref<3x32x15xf32, #tpu.memory_space<vmem>>, %arg3: memref<63x32xf32, #tpu.memory_space<vmem>>, %arg4: memref<63x32xf32, #tpu.memory_space<vmem>>, %arg5: memref<128x32xf32, #tpu.memory_space<vmem>>, %arg6: memref<32x16xf32, #tpu.memory_space<vmem>>, %arg7: memref<15x16xf32, #tpu.memory_space<vmem>>, %arg8: memref<16x16xf32, #tpu.memory_space<vmem>>, %arg9: memref<32x4xf32, #tpu.memory_space<vmem>>, %arg10: memref<16x4xf32, #tpu.memory_space<vmem>>, %arg11: memref<8x32xf32, #tpu.memory_space<vmem>>, %arg12: memref<32x4xf32, #tpu.memory_space<vmem>>) attributes {dimension_semantics = [#tpu.dimension_semantics<parallel>], iteration_bounds = array<i64: 1>, scalar_prefetch = 0 : i64, scratch_operands = 0 : i64, tpu.core_type = #tpu.core_type<tc>, window_params = [{transform_indices = @transform_0, window_bounds = array<i64: 3, 32, 63>}, {transform_indices = @transform_1, window_bounds = array<i64: 3, 32, 15>}, {pipeline_mode = #tpu.pipeline_mode<synchronous>, transform_indices = @transform_2, window_bounds = array<i64: 63, 32>}, {pipeline_mode = #tpu.pipeline_mode<synchronous>, transform_indices = @transform_3, window_bounds = array<i64: 63, 32>}, {pipeline_mode = #tpu.pipeline_mode<synchronous>, transform_indices = @transform_4, window_bounds = array<i64: 128, 32>}, {pipeline_mode = #tpu.pipeline_mode<synchronous>, transform_indices = @transform_5, window_bounds = array<i64: 32, 16>}, {pipeline_mode = #tpu.pipeline_mode<synchronous>, transform_indices = @transform_6, window_bounds = array<i64: 15, 16>}, {pipeline_mode = #tpu.pipeline_mode<synchronous>, transform_indices = @transform_7, window_bounds = array<i64: 16, 16>}, {pipeline_mode = #tpu.pipeline_mode<synchronous>, transform_indices = @transform_8, window_bounds = array<i64: 32, 4>}, {pipeline_mode = #tpu.pipeline_mode<synchronous>, transform_indices = @transform_9, window_bounds = array<i64: 16, 4>}, {pipeline_mode = #tpu.pipeline_mode<synchronous>, transform_indices = @transform_10, window_bounds = array<i64: 8, 32>}, {transform_indices = @transform_11, window_bounds = array<i64: 32, 4>}]} {
    %c0 = arith.constant 0 : index
    %c0_0 = arith.constant 0 : index
    %c0_1 = arith.constant 0 : index
    %0 = vector.load %arg1[%c0, %c0_0, %c0_1] : memref<3x32x63xf32, #tpu.memory_space<vmem>>, vector<3x32x63xf32>
    %1 = vector.shape_cast %0 : vector<3x32x63xf32> to vector<96x63xf32>
    %c0_2 = arith.constant 0 : index
    %c0_3 = arith.constant 0 : index
    %c0_4 = arith.constant 0 : index
    %2 = vector.load %arg2[%c0_2, %c0_3, %c0_4] : memref<3x32x15xf32, #tpu.memory_space<vmem>>, vector<3x32x15xf32>
    %3 = vector.shape_cast %2 : vector<3x32x15xf32> to vector<96x15xf32>
    %c0_5 = arith.constant 0 : index
    %c0_6 = arith.constant 0 : index
    %4 = vector.load %arg5[%c0_5, %c0_6] : memref<128x32xf32, #tpu.memory_space<vmem>>, vector<128x32xf32>
    %5 = vector.extract_strided_slice %4 {offsets = [0, 0], sizes = [32, 32], strides = [1, 1]} : vector<128x32xf32> to vector<32x32xf32>
    %6 = vector.extract_strided_slice %4 {offsets = [32, 0], sizes = [32, 32], strides = [1, 1]} : vector<128x32xf32> to vector<32x32xf32>
    %7 = vector.extract_strided_slice %4 {offsets = [64, 0], sizes = [32, 32], strides = [1, 1]} : vector<128x32xf32> to vector<32x32xf32>
    %8 = vector.extract_strided_slice %4 {offsets = [96, 0], sizes = [32, 32], strides = [1, 1]} : vector<128x32xf32> to vector<32x32xf32>
    %c0_7 = arith.constant 0 : index
    %c0_8 = arith.constant 0 : index
    %9 = vector.load %arg11[%c0_7, %c0_8] : memref<8x32xf32, #tpu.memory_space<vmem>>, vector<8x32xf32>
    %10 = vector.extract_strided_slice %9 {offsets = [0, 0], sizes = [1, 32], strides = [1, 1]} : vector<8x32xf32> to vector<1x32xf32>
    %11 = vector.extract_strided_slice %9 {offsets = [1, 0], sizes = [1, 32], strides = [1, 1]} : vector<8x32xf32> to vector<1x32xf32>
    %12 = vector.extract_strided_slice %9 {offsets = [2, 0], sizes = [1, 32], strides = [1, 1]} : vector<8x32xf32> to vector<1x32xf32>
    %13 = vector.extract_strided_slice %9 {offsets = [3, 0], sizes = [1, 32], strides = [1, 1]} : vector<8x32xf32> to vector<1x32xf32>
    %14 = vector.extract_strided_slice %9 {offsets = [4, 0], sizes = [1, 32], strides = [1, 1]} : vector<8x32xf32> to vector<1x32xf32>
    %15 = vector.extract_strided_slice %9 {offsets = [5, 0], sizes = [1, 16], strides = [1, 1]} : vector<8x32xf32> to vector<1x16xf32>
    %16 = vector.extract_strided_slice %9 {offsets = [6, 0], sizes = [1, 16], strides = [1, 1]} : vector<8x32xf32> to vector<1x16xf32>
    %17 = vector.extract_strided_slice %9 {offsets = [7, 0], sizes = [1, 4], strides = [1, 1]} : vector<8x32xf32> to vector<1x4xf32>
    %c0_9 = arith.constant 0 : index
    %c0_10 = arith.constant 0 : index
    %18 = vector.load %arg3[%c0_9, %c0_10] : memref<63x32xf32, #tpu.memory_space<vmem>>, vector<63x32xf32>
    %cst = arith.constant dense<0.000000e+00> : vector<96x32xf32>
    %19 = tpu.matmul %1, %18, %cst {dimension_numbers = #tpu.dot_dimension_numbers<[1], [0], [0], [1], [0, 0, 1, 1], [], []>} : vector<96x63xf32>, vector<63x32xf32>, vector<96x32xf32> -> vector<96x32xf32>
    %20 = vector.broadcast %10 : vector<1x32xf32> to vector<96x32xf32>
    %21 = arith.addf %19, %20 : vector<96x32xf32>
    %cst_11 = arith.constant 0.000000e+00 : f32
    %22 = vector.broadcast %cst_11 : f32 to vector<96x32xf32>
    %23 = arith.maximumf %21, %22 : vector<96x32xf32>
    %cst_12 = arith.constant dense<0.000000e+00> : vector<96x32xf32>
    %24 = tpu.matmul %23, %5, %cst_12 {dimension_numbers = #tpu.dot_dimension_numbers<[1], [0], [0], [1], [0, 0, 1, 1], [], []>} : vector<96x32xf32>, vector<32x32xf32>, vector<96x32xf32> -> vector<96x32xf32>
    %25 = vector.broadcast %11 : vector<1x32xf32> to vector<96x32xf32>
    %26 = arith.addf %24, %25 : vector<96x32xf32>
    %cst_13 = arith.constant 0.000000e+00 : f32
    %27 = vector.broadcast %cst_13 : f32 to vector<96x32xf32>
    %28 = arith.maximumf %26, %27 : vector<96x32xf32>
    %cst_14 = arith.constant dense<0.000000e+00> : vector<96x32xf32>
    %29 = tpu.matmul %28, %6, %cst_14 {dimension_numbers = #tpu.dot_dimension_numbers<[1], [0], [0], [1], [0, 0, 1, 1], [], []>} : vector<96x32xf32>, vector<32x32xf32>, vector<96x32xf32> -> vector<96x32xf32>
    %30 = vector.broadcast %12 : vector<1x32xf32> to vector<96x32xf32>
    %31 = arith.addf %29, %30 : vector<96x32xf32>
    %cst_15 = arith.constant 0.000000e+00 : f32
    %32 = vector.broadcast %cst_15 : f32 to vector<96x32xf32>
    %33 = arith.maximumf %31, %32 : vector<96x32xf32>
    %cst_16 = arith.constant dense<0.000000e+00> : vector<96x32xf32>
    %34 = tpu.matmul %33, %7, %cst_16 {dimension_numbers = #tpu.dot_dimension_numbers<[1], [0], [0], [1], [0, 0, 1, 1], [], []>} : vector<96x32xf32>, vector<32x32xf32>, vector<96x32xf32> -> vector<96x32xf32>
    %c0_17 = arith.constant 0 : index
    %c0_18 = arith.constant 0 : index
    %35 = vector.load %arg4[%c0_17, %c0_18] : memref<63x32xf32, #tpu.memory_space<vmem>>, vector<63x32xf32>
    %cst_19 = arith.constant dense<0.000000e+00> : vector<96x32xf32>
    %36 = tpu.matmul %1, %35, %cst_19 {dimension_numbers = #tpu.dot_dimension_numbers<[1], [0], [0], [1], [0, 0, 1, 1], [], []>} : vector<96x63xf32>, vector<63x32xf32>, vector<96x32xf32> -> vector<96x32xf32>
    %37 = arith.addf %34, %36 : vector<96x32xf32>
    %38 = vector.broadcast %13 : vector<1x32xf32> to vector<96x32xf32>
    %39 = arith.addf %37, %38 : vector<96x32xf32>
    %cst_20 = arith.constant 0.000000e+00 : f32
    %40 = vector.broadcast %cst_20 : f32 to vector<96x32xf32>
    %41 = arith.maximumf %39, %40 : vector<96x32xf32>
    %cst_21 = arith.constant dense<0.000000e+00> : vector<96x32xf32>
    %42 = tpu.matmul %41, %8, %cst_21 {dimension_numbers = #tpu.dot_dimension_numbers<[1], [0], [0], [1], [0, 0, 1, 1], [], []>} : vector<96x32xf32>, vector<32x32xf32>, vector<96x32xf32> -> vector<96x32xf32>
    %43 = vector.broadcast %14 : vector<1x32xf32> to vector<96x32xf32>
    %44 = arith.addf %42, %43 : vector<96x32xf32>
    %c0_22 = arith.constant 0 : index
    %c0_23 = arith.constant 0 : index
    %45 = vector.load %arg6[%c0_22, %c0_23] : memref<32x16xf32, #tpu.memory_space<vmem>>, vector<32x16xf32>
    %cst_24 = arith.constant dense<0.000000e+00> : vector<96x16xf32>
    %46 = tpu.matmul %44, %45, %cst_24 {dimension_numbers = #tpu.dot_dimension_numbers<[1], [0], [0], [1], [0, 0, 1, 1], [], []>} : vector<96x32xf32>, vector<32x16xf32>, vector<96x16xf32> -> vector<96x16xf32>
    %c0_25 = arith.constant 0 : index
    %c0_26 = arith.constant 0 : index
    %47 = vector.load %arg7[%c0_25, %c0_26] : memref<15x16xf32, #tpu.memory_space<vmem>>, vector<15x16xf32>
    %cst_27 = arith.constant dense<0.000000e+00> : vector<96x16xf32>
    %48 = tpu.matmul %3, %47, %cst_27 {dimension_numbers = #tpu.dot_dimension_numbers<[1], [0], [0], [1], [0, 0, 1, 1], [], []>} : vector<96x15xf32>, vector<15x16xf32>, vector<96x16xf32> -> vector<96x16xf32>
    %49 = arith.addf %46, %48 : vector<96x16xf32>
    %50 = vector.broadcast %15 : vector<1x16xf32> to vector<96x16xf32>
    %51 = arith.addf %49, %50 : vector<96x16xf32>
    %52 = vector.extract_strided_slice %41 {offsets = [0, 0], sizes = [32, 32], strides = [1, 1]} : vector<96x32xf32> to vector<32x32xf32>
    %53 = vector.extract_strided_slice %51 {offsets = [0, 0], sizes = [32, 16], strides = [1, 1]} : vector<96x16xf32> to vector<32x16xf32>
    %54 = vector.extract_strided_slice %41 {offsets = [32, 0], sizes = [32, 32], strides = [1, 1]} : vector<96x32xf32> to vector<32x32xf32>
    %55 = arith.addf %52, %54 : vector<32x32xf32>
    %56 = vector.extract_strided_slice %51 {offsets = [32, 0], sizes = [32, 16], strides = [1, 1]} : vector<96x16xf32> to vector<32x16xf32>
    %57 = arith.addf %53, %56 : vector<32x16xf32>
    %58 = vector.extract_strided_slice %41 {offsets = [64, 0], sizes = [32, 32], strides = [1, 1]} : vector<96x32xf32> to vector<32x32xf32>
    %59 = arith.addf %55, %58 : vector<32x32xf32>
    %60 = vector.extract_strided_slice %51 {offsets = [64, 0], sizes = [32, 16], strides = [1, 1]} : vector<96x16xf32> to vector<32x16xf32>
    %61 = arith.addf %57, %60 : vector<32x16xf32>
    %cst_28 = arith.constant 0.333333343 : f32
    %62 = vector.broadcast %cst_28 : f32 to vector<32x32xf32>
    %63 = arith.mulf %59, %62 : vector<32x32xf32>
    %cst_29 = arith.constant 0.333333343 : f32
    %64 = vector.broadcast %cst_29 : f32 to vector<32x16xf32>
    %65 = arith.mulf %61, %64 : vector<32x16xf32>
    %cst_30 = arith.constant 0.000000e+00 : f32
    %66 = vector.broadcast %cst_30 : f32 to vector<32x16xf32>
    %67 = arith.maximumf %65, %66 : vector<32x16xf32>
    %c0_31 = arith.constant 0 : index
    %c0_32 = arith.constant 0 : index
    %68 = vector.load %arg8[%c0_31, %c0_32] : memref<16x16xf32, #tpu.memory_space<vmem>>, vector<16x16xf32>
    %cst_33 = arith.constant dense<0.000000e+00> : vector<32x16xf32>
    %69 = tpu.matmul %67, %68, %cst_33 {dimension_numbers = #tpu.dot_dimension_numbers<[1], [0], [0], [1], [0, 0, 1, 1], [], []>} : vector<32x16xf32>, vector<16x16xf32>, vector<32x16xf32> -> vector<32x16xf32>
    %70 = vector.broadcast %16 : vector<1x16xf32> to vector<32x16xf32>
    %71 = arith.addf %69, %70 : vector<32x16xf32>
    %cst_34 = arith.constant 0.000000e+00 : f32
    %72 = vector.broadcast %cst_34 : f32 to vector<32x16xf32>
    %73 = arith.maximumf %71, %72 : vector<32x16xf32>
    %c0_35 = arith.constant 0 : index
    %c0_36 = arith.constant 0 : index
    %74 = vector.load %arg9[%c0_35, %c0_36] : memref<32x4xf32, #tpu.memory_space<vmem>>, vector<32x4xf32>
    %cst_37 = arith.constant dense<0.000000e+00> : vector<32x4xf32>
    %75 = tpu.matmul %63, %74, %cst_37 {dimension_numbers = #tpu.dot_dimension_numbers<[1], [0], [0], [1], [0, 0, 1, 1], [], []>} : vector<32x32xf32>, vector<32x4xf32>, vector<32x4xf32> -> vector<32x4xf32>
    %c0_38 = arith.constant 0 : index
    %c0_39 = arith.constant 0 : index
    %76 = vector.load %arg10[%c0_38, %c0_39] : memref<16x4xf32, #tpu.memory_space<vmem>>, vector<16x4xf32>
    %cst_40 = arith.constant dense<0.000000e+00> : vector<32x4xf32>
    %77 = tpu.matmul %73, %76, %cst_40 {dimension_numbers = #tpu.dot_dimension_numbers<[1], [0], [0], [1], [0, 0, 1, 1], [], []>} : vector<32x16xf32>, vector<16x4xf32>, vector<32x4xf32> -> vector<32x4xf32>
    %78 = arith.addf %75, %77 : vector<32x4xf32>
    %79 = vector.broadcast %17 : vector<1x4xf32> to vector<32x4xf32>
    %80 = arith.addf %78, %79 : vector<32x4xf32>
    %c0_41 = arith.constant 0 : index
    %c0_42 = arith.constant 0 : index
    %81 = vector.load %arg12[%c0_41, %c0_42] : memref<32x4xf32, #tpu.memory_space<vmem>>, vector<32x4xf32>
    tpu.vector_store %arg12[%c0_41, %c0_42], %80 {strides = array<i32>} : memref<32x4xf32, #tpu.memory_space<vmem>>, vector<32x4xf32>,
    return
  }
  func.func @transform_0(%arg0: i32) -> (i32, i32, i32) {
    %c0_i32 = arith.constant 0 : i32
    %c0_i32_0 = arith.constant 0 : i32
    %c0_i32_1 = arith.constant 0 : i32
    return %c0_i32, %arg0, %c0_i32_0 : i32, i32, i32
  }
  func.func @transform_1(%arg0: i32) -> (i32, i32, i32) {
    %c0_i32 = arith.constant 0 : i32
    %c0_i32_0 = arith.constant 0 : i32
    %c0_i32_1 = arith.constant 0 : i32
    return %c0_i32, %arg0, %c0_i32_0 : i32, i32, i32
  }
  func.func @transform_2(%arg0: i32) -> (i32, i32) {
    %c0_i32 = arith.constant 0 : i32
    %c0_i32_0 = arith.constant 0 : i32
    %c0_i32_1 = arith.constant 0 : i32
    return %c0_i32, %c0_i32_0 : i32, i32
  }
  func.func @transform_3(%arg0: i32) -> (i32, i32) {
    %c0_i32 = arith.constant 0 : i32
    %c0_i32_0 = arith.constant 0 : i32
    %c0_i32_1 = arith.constant 0 : i32
    return %c0_i32, %c0_i32_0 : i32, i32
  }
  func.func @transform_4(%arg0: i32) -> (i32, i32) {
    %c0_i32 = arith.constant 0 : i32
    %c0_i32_0 = arith.constant 0 : i32
    %c0_i32_1 = arith.constant 0 : i32
    return %c0_i32, %c0_i32_0 : i32, i32
  }
  func.func @transform_5(%arg0: i32) -> (i32, i32) {
    %c0_i32 = arith.constant 0 : i32
    %c0_i32_0 = arith.constant 0 : i32
    %c0_i32_1 = arith.constant 0 : i32
    return %c0_i32, %c0_i32_0 : i32, i32
  }
  func.func @transform_6(%arg0: i32) -> (i32, i32) {
    %c0_i32 = arith.constant 0 : i32
    %c0_i32_0 = arith.constant 0 : i32
    %c0_i32_1 = arith.constant 0 : i32
    return %c0_i32, %c0_i32_0 : i32, i32
  }
  func.func @transform_7(%arg0: i32) -> (i32, i32) {
    %c0_i32 = arith.constant 0 : i32
    %c0_i32_0 = arith.constant 0 : i32
    %c0_i32_1 = arith.constant 0 : i32
    return %c0_i32, %c0_i32_0 : i32, i32
  }
  func.func @transform_8(%arg0: i32) -> (i32, i32) {
    %c0_i32 = arith.constant 0 : i32
    %c0_i32_0 = arith.constant 0 : i32
    %c0_i32_1 = arith.constant 0 : i32
    return %c0_i32, %c0_i32_0 : i32, i32
  }
  func.func @transform_9(%arg0: i32) -> (i32, i32) {
    %c0_i32 = arith.constant 0 : i32
    %c0_i32_0 = arith.constant 0 : i32
    %c0_i32_1 = arith.constant 0 : i32
    return %c0_i32, %c0_i32_0 : i32, i32
  }
  func.func @transform_10(%arg0: i32) -> (i32, i32) {
    %c0_i32 = arith.constant 0 : i32
    %c0_i32_0 = arith.constant 0 : i32
    %c0_i32_1 = arith.constant 0 : i32
    return %c0_i32, %c0_i32_0 : i32, i32
  }
  func.func @transform_11(%arg0: i32) -> (i32, i32) {
    %c0_i32 = arith.constant 0 : i32
    %c0_i32_0 = arith.constant 0 : i32
    return %arg0, %c0_i32 : i32, i32
  }
}

</mosaic_0001>

<llo_original>
// kernel: tpu_custom_call.1
$region0: #{tpu_custom_call.1}
  #allocation0 [shape = 'u32[]', space=smem, size = 0x4, offset = 0x4, fixed_abs, tag = 'smem constant byte address 0x4 - core index']
  #allocation1 [shape = 'u32[144,128]{1,0:T(1,128)}', space=vmem, size = 0x12000, scoped, tag = 'internal scratch']
  %s0 = inlined_call_operand.vmem [shape: f32[3,32,63], index: 0, kind: input, shape index: {}]
  %s1 = inlined_call_operand.vmem [shape: f32[3,32,15], index: 1, kind: input, shape index: {}]
  %s2 = inlined_call_operand.vmem [shape: f32[63,32], index: 2, kind: input, shape index: {}]
  %s3 = inlined_call_operand.vmem [shape: f32[63,32], index: 3, kind: input, shape index: {}]
  %s4 = inlined_call_operand.vmem [shape: f32[128,32], index: 4, kind: input, shape index: {}]
  %s5 = inlined_call_operand.vmem [shape: f32[32,16], index: 5, kind: input, shape index: {}]
  %s6 = inlined_call_operand.vmem [shape: f32[15,16], index: 6, kind: input, shape index: {}]
  %s7 = inlined_call_operand.vmem [shape: f32[16,16], index: 7, kind: input, shape index: {}]
  %s8 = inlined_call_operand.vmem [shape: f32[32,4], index: 8, kind: input, shape index: {}]
  %s9 = inlined_call_operand.vmem [shape: f32[16,4], index: 9, kind: input, shape index: {}]
  %s10 = inlined_call_operand.vmem [shape: f32[8,32], index: 10, kind: input, shape index: {}]
  %s11 = inlined_call_operand.vmem [shape: f32[32,4], index: 11, kind: output, shape index: {}]
  %s12 = sld [smem:[#allocation0]]
  $region54: #{tpu_custom_call.1} parent=0
    _
  %s14 = ssub.s32 1, %s12
  %s15 = scalar_select 0, %s14, %s12
  // Predicated region
  $region2: #{tpu_custom_call.1} parent=0 // pred_check
    _
  $region3: #{tpu_custom_call.1} parent=0 // pred_check_branch
    %17 = sbr.rel (0) target = $region5
  $region4: #{tpu_custom_call.1} parent=0 // pred_region
    _
  $region5: #{tpu_custom_call.1} parent=0 // pred_fallthru
    _
  // Predicated region
  $region6: #{tpu_custom_call.1} parent=0 // pred_check
    _
  $region7: #{tpu_custom_call.1} parent=0 // pred_check_branch
    %19 = sbr.rel (0) target = $region9
  $region8: #{tpu_custom_call.1} parent=0 // pred_region
    _
  $region9: #{tpu_custom_call.1} parent=0 // pred_fallthru
    _
  // Predicated region
  $region10: #{tpu_custom_call.1} parent=0 // pred_check
    _
  $region11: #{tpu_custom_call.1} parent=0 // pred_check_branch
    %21 = sbr.rel (0) target = $region13
  $region12: #{tpu_custom_call.1} parent=0 // pred_region
    _
  $region13: #{tpu_custom_call.1} parent=0 // pred_fallthru
    _
  // Predicated region
  $region14: #{tpu_custom_call.1} parent=0 // pred_check
    _
  $region15: #{tpu_custom_call.1} parent=0 // pred_check_branch
    %23 = sbr.rel (0) target = $region17
  $region16: #{tpu_custom_call.1} parent=0 // pred_region
    _
  $region17: #{tpu_custom_call.1} parent=0 // pred_fallthru
    _
  // Predicated region
  $region18: #{tpu_custom_call.1} parent=0 // pred_check
    _
  $region19: #{tpu_custom_call.1} parent=0 // pred_check_branch
    %25 = sbr.rel (0) target = $region21
  $region20: #{tpu_custom_call.1} parent=0 // pred_region
    _
  $region21: #{tpu_custom_call.1} parent=0 // pred_fallthru
    _
  // Predicated region
  $region22: #{tpu_custom_call.1} parent=0 // pred_check
    _
  $region23: #{tpu_custom_call.1} parent=0 // pred_check_branch
    %27 = sbr.rel (0) target = $region25
  $region24: #{tpu_custom_call.1} parent=0 // pred_region
    _
  $region25: #{tpu_custom_call.1} parent=0 // pred_fallthru
    _
  // Predicated region
  $region26: #{tpu_custom_call.1} parent=0 // pred_check
    _
  $region27: #{tpu_custom_call.1} parent=0 // pred_check_branch
    %29 = sbr.rel (0) target = $region29
  $region28: #{tpu_custom_call.1} parent=0 // pred_region
    _
  $region29: #{tpu_custom_call.1} parent=0 // pred_fallthru
    _
  // Predicated region
  $region30: #{tpu_custom_call.1} parent=0 // pred_check
    _
  $region31: #{tpu_custom_call.1} parent=0 // pred_check_branch
    %31 = sbr.rel (0) target = $region33
  $region32: #{tpu_custom_call.1} parent=0 // pred_region
    _
  $region33: #{tpu_custom_call.1} parent=0 // pred_fallthru
    _
  // Predicated region
  $region34: #{tpu_custom_call.1} parent=0 // pred_check
    _
  $region35: #{tpu_custom_call.1} parent=0 // pred_check_branch
    %33 = sbr.rel (0) target = $region37
  $region36: #{tpu_custom_call.1} parent=0 // pred_region
    _
  $region37: #{tpu_custom_call.1} parent=0 // pred_fallthru
    _
  // Predicated region
  $region38: #{tpu_custom_call.1} parent=0 // pred_check
    _
  $region39: #{tpu_custom_call.1} parent=0 // pred_check_branch
    %35 = sbr.rel (0) target = $region41
  $region40: #{tpu_custom_call.1} parent=0 // pred_region
    _
  $region41: #{tpu_custom_call.1} parent=0 // pred_fallthru
    _
  // Predicated region
  $region42: #{tpu_custom_call.1} parent=0 // pred_check
    _
  $region43: #{tpu_custom_call.1} parent=0 // pred_check_branch
    %37 = sbr.rel (0) target = $region45
  $region44: #{tpu_custom_call.1} parent=0 // pred_region
    _
  $region45: #{tpu_custom_call.1} parent=0 // pred_fallthru
    _
  %v38 = vld [vmem:[%s0] sm:$0xff]
  %v39 = vld [vmem:[%s0 + $0x8] sm:$0xff]
  %v40 = vld [vmem:[%s0 + $0x10] sm:$0xff]
  %v41 = vld [vmem:[%s0 + $0x18] sm:$0xff]
  %v42 = vld [vmem:[%s0 + $0x20] sm:$0xff]
  %v43 = vld [vmem:[%s0 + $0x28] sm:$0xff]
  %v44 = vld [vmem:[%s0 + $0x30] sm:$0xff]
  %v45 = vld [vmem:[%s0 + $0x38] sm:$0xff]
  %v46 = vld [vmem:[%s0 + $0x40] sm:$0xff]
  %v47 = vld [vmem:[%s0 + $0x48] sm:$0xff]
  %v48 = vld [vmem:[%s0 + $0x50] sm:$0xff]
  %v49 = vld [vmem:[%s0 + $0x58] sm:$0xff]
  %v50 = vld [vmem:[%s1] sm:$0xff]
  %v51 = vld [vmem:[%s1 + $0x8] sm:$0xff]
  %v52 = vld [vmem:[%s1 + $0x10] sm:$0xff]
  %v53 = vld [vmem:[%s1 + $0x18] sm:$0xff]
  %v54 = vld [vmem:[%s1 + $0x20] sm:$0xff]
  %v55 = vld [vmem:[%s1 + $0x28] sm:$0xff]
  %v56 = vld [vmem:[%s1 + $0x30] sm:$0xff]
  %v57 = vld [vmem:[%s1 + $0x38] sm:$0xff]
  %v58 = vld [vmem:[%s1 + $0x40] sm:$0xff]
  %v59 = vld [vmem:[%s1 + $0x48] sm:$0xff]
  %v60 = vld [vmem:[%s1 + $0x50] sm:$0xff]
  %v61 = vld [vmem:[%s1 + $0x58] sm:$0xff]
  %v62 = vld [vmem:[%s4] sm:$0xff]
  %v63 = vld [vmem:[%s4 + $0x8] sm:$0xff]
  %v64 = vld [vmem:[%s4 + $0x10] sm:$0xff]
  %v65 = vld [vmem:[%s4 + $0x18] sm:$0xff]
  %v66 = vld [vmem:[%s4 + $0x20] sm:$0xff]
  %v67 = vld [vmem:[%s4 + $0x28] sm:$0xff]
  %v68 = vld [vmem:[%s4 + $0x30] sm:$0xff]
  %v69 = vld [vmem:[%s4 + $0x38] sm:$0xff]
  %v70 = vld [vmem:[%s4 + $0x40] sm:$0xff]
  %v71 = vld [vmem:[%s4 + $0x48] sm:$0xff]
  %v72 = vld [vmem:[%s4 + $0x50] sm:$0xff]
  %v73 = vld [vmem:[%s4 + $0x58] sm:$0xff]
  %v74 = vld [vmem:[%s4 + $0x60] sm:$0xff]
  %v75 = vld [vmem:[%s4 + $0x68] sm:$0xff]
  %v76 = vld [vmem:[%s4 + $0x70] sm:$0xff]
  %v77 = vld [vmem:[%s4 + $0x78] sm:$0xff]
  %v78 = vld [vmem:[%s10] sm:$0xff]
  %v79 = vld [vmem:[%s2] sm:$0xff]
  %v80 = vld [vmem:[%s2 + $0x8] sm:$0xff]
  %v81 = vld [vmem:[%s2 + $0x10] sm:$0xff]
  %v82 = vld [vmem:[%s2 + $0x18] sm:$0xff]
  %v83 = vld [vmem:[%s2 + $0x20] sm:$0xff]
  %v84 = vld [vmem:[%s2 + $0x28] sm:$0xff]
  %v85 = vld [vmem:[%s2 + $0x30] sm:$0xff]
  %v86 = vld [vmem:[%s2 + $0x38] sm:$0x7f]
  %v87 = vlaneseq
  %v88 = vshrl.u32 %v87, 7
  %v89 = vsub.s32 0, %v88
  %v90 = vrot.slane %v78, %v89
  %vm91 = vcmask 515072
  %v93 = vsel %vm91, %v38, 0
  %v96 = vsel %vm91, %v39, 0
  %v99 = vsel %vm91, %v40, 0
  %v102 = vsel %vm91, %v41, 0
  %v105 = vsel %vm91, %v42, 0
  %v108 = vsel %vm91, %v43, 0
  %v111 = vsel %vm91, %v44, 0
  %v114 = vsel %vm91, %v45, 0
  %v117 = vsel %vm91, %v46, 0
  %v120 = vsel %vm91, %v47, 0
  %v123 = vsel %vm91, %v48, 0
  %v126 = vsel %vm91, %v49, 0
  %vm128 = vcmask 1046528
  %v130 = vsel %vm128, %v86, 0
  %132 = vmatprep.subr.mxu0 0.0
  %133 = vmatpush1.msra.mxu0 0.0
  %134 = vmatprep.subr.mxu0 0.0
  %135 = vmatpush1.msra.mxu0 0.0
  %136 = vmatprep.subr.mxu0 0.0
  %137 = vmatpush1.msra.mxu0 0.0
  %138 = vmatprep.subr.mxu0 0.0
  %139 = vmatpush1.msra.mxu0 0.0
  %140 = vmatprep.subr.mxu0 0.0
  %141 = vmatpush1.msra.mxu0 0.0
  %142 = vmatprep.subr.mxu0 0.0
  %143 = vmatpush1.msra.mxu0 0.0
  %144 = vmatprep.subr.mxu0 0.0
  %145 = vmatpush1.msra.mxu0 0.0
  %146 = vmatprep.subr.mxu0 0.0
  %147 = vmatpush1.msra.mxu0 0.0
  %148 = vmatprep.subr.mxu0 0.0
  %149 = vmatpush1.msra.mxu0 %v130
  %150 = vmatprep.subr.mxu0 0.0
  %151 = vmatpush1.msra.mxu0 %v85
  %152 = vmatprep.subr.mxu0 0.0
  %153 = vmatpush1.msra.mxu0 %v84
  %154 = vmatprep.subr.mxu0 0.0
  %155 = vmatpush1.msra.mxu0 %v83
  %156 = vmatprep.subr.mxu0 0.0
  %157 = vmatpush1.msra.mxu0 %v82
  %158 = vmatprep.subr.mxu0 0.0
  %159 = vmatpush1.msra.mxu0 %v81
  %160 = vmatprep.subr.mxu0 0.0
  %161 = vmatpush1.msra.mxu0 %v80
  %162 = vmatprep.subr.mxu0 0.0
  %163 = vmatpush1.msra.mxu0 %v79
  %164 = vmatprep.subr.mxu0 0.0
  %165 = vmatpush2.msra.mxu0 0.0
  %166 = vmatprep.subr.mxu0 0.0
  %167 = vmatpush2.msra.mxu0 0.0
  %168 = vmatprep.subr.mxu0 0.0
  %169 = vmatpush2.msra.mxu0 0.0
  %170 = vmatprep.subr.mxu0 0.0
  %171 = vmatpush2.msra.mxu0 0.0
  %172 = vmatprep.subr.mxu0 0.0
  %173 = vmatpush2.msra.mxu0 0.0
  %174 = vmatprep.subr.mxu0 0.0
  %175 = vmatpush2.msra.mxu0 0.0
  %176 = vmatprep.subr.mxu0 0.0
  %177 = vmatpush2.msra.mxu0 0.0
  %178 = vmatprep.subr.mxu0 0.0
  %179 = vmatpush2.msra.mxu0 0.0
  %180 = vmatprep.subr.mxu0 0.0
  %181 = vmatpush2.msra.mxu0 0.0
  %182 = vmatprep.subr.mxu0 0.0
  %183 = vmatpush2.msra.mxu0 0.0
  %184 = vmatprep.subr.mxu0 0.0
  %185 = vmatpush2.msra.mxu0 0.0
  %186 = vmatprep.subr.mxu0 0.0
  %187 = vmatpush2.msra.mxu0 0.0
  %188 = vmatprep.subr.mxu0 0.0
  %189 = vmatpush2.msra.mxu0 0.0
  %190 = vmatprep.subr.mxu0 0.0
  %191 = vmatpush2.msra.mxu0 0.0
  %192 = vmatprep.subr.mxu0 0.0
  %193 = vmatpush2.msra.mxu0 0.0
  %194 = vmatprep.subr.mxu0 0.0
  %195 = vmatpush2.msra.mxu0 0.0
  %196 = vmatprep.mubr.f32.mxu0 0.0
  %197 = vmatmul.mubr.f32.gmra.mxu0 %v93
  %v198 = vpop.f32.mrf.mxu0
  %v199 = vadd.f32 %v90, %v198
  %v200 = vpop.f32.mrf.mxu0
  %201 = vmatprep.mubr.f32.mxu0 0.0
  %202 = vmatmul.mubr.f32.gmra.mxu0 %v96
  %v203 = vpop.f32.mrf.mxu0
  %v204 = vadd.f32 %v90, %v203
  %v205 = vpop.f32.mrf.mxu0
  %206 = vmatprep.mubr.f32.mxu0 0.0
  %207 = vmatmul.mubr.f32.gmra.mxu0 %v99
  %v208 = vpop.f32.mrf.mxu0
  %v209 = vadd.f32 %v90, %v208
  %v210 = vpop.f32.mrf.mxu0
  %211 = vmatprep.mubr.f32.mxu0 0.0
  %212 = vmatmul.mubr.f32.gmra.mxu0 %v102
  %v213 = vpop.f32.mrf.mxu0
  %v214 = vadd.f32 %v90, %v213
  %v215 = vpop.f32.mrf.mxu0
  %216 = vmatprep.mubr.f32.mxu0 0.0
  %217 = vmatmul.mubr.f32.gmra.mxu0 %v105
  %v218 = vpop.f32.mrf.mxu0
  %v219 = vadd.f32 %v90, %v218
  %v220 = vpop.f32.mrf.mxu0
  %221 = vmatprep.mubr.f32.mxu0 0.0
  %222 = vmatmul.mubr.f32.gmra.mxu0 %v108
  %v223 = vpop.f32.mrf.mxu0
  %v224 = vadd.f32 %v90, %v223
  %v225 = vpop.f32.mrf.mxu0
  %226 = vmatprep.mubr.f32.mxu0 0.0
  %227 = vmatmul.mubr.f32.gmra.mxu0 %v111
  %v228 = vpop.f32.mrf.mxu0
  %v229 = vadd.f32 %v90, %v228
  %v230 = vpop.f32.mrf.mxu0
  %231 = vmatprep.mubr.f32.mxu0 0.0
  %232 = vmatmul.mubr.f32.gmra.mxu0 %v114
  %v233 = vpop.f32.mrf.mxu0
  %v234 = vadd.f32 %v90, %v233
  %v235 = vpop.f32.mrf.mxu0
  %236 = vmatprep.mubr.f32.mxu0 0.0
  %237 = vmatmul.mubr.f32.gmra.mxu0 %v117
  %v238 = vpop.f32.mrf.mxu0
  %v239 = vadd.f32 %v90, %v238
  %v240 = vpop.f32.mrf.mxu0
  %241 = vmatprep.mubr.f32.mxu0 0.0
  %242 = vmatmul.mubr.f32.gmra.mxu0 %v120
  %v243 = vpop.f32.mrf.mxu0
  %v244 = vadd.f32 %v90, %v243
  %v245 = vpop.f32.mrf.mxu0
  %246 = vmatprep.mubr.f32.mxu0 0.0
  %247 = vmatmul.mubr.f32.gmra.mxu0 %v123
  %v248 = vpop.f32.mrf.mxu0
  %v249 = vadd.f32 %v90, %v248
  %v250 = vpop.f32.mrf.mxu0
  %251 = vmatprep.mubr.f32.mxu0 0.0
  %252 = vmatmul.mubr.f32.gmra.mxu0 %v126
  %v253 = vpop.f32.mrf.mxu0
  %v254 = vadd.f32 %v90, %v253
  %v255 = vpop.f32.mrf.mxu0
  %256 = vdwg.mxu0
  %v257 = vmax.f32 %v199, 0.0
  %v258 = vmax.f32 %v204, 0.0
  %v259 = vmax.f32 %v209, 0.0
  %v260 = vmax.f32 %v214, 0.0
  %v261 = vmax.f32 %v219, 0.0
  %v262 = vmax.f32 %v224, 0.0
  %v263 = vmax.f32 %v229, 0.0
  %v264 = vmax.f32 %v234, 0.0
  %v265 = vmax.f32 %v239, 0.0
  %v266 = vmax.f32 %v244, 0.0
  %v267 = vmax.f32 %v249, 0.0
  %v268 = vmax.f32 %v254, 0.0
  %v269 = vlaneseq
  %v270 = vshrl.u32 %v269, 7
  %v271 = vsub.s32 1, %v270
  %v272 = vrot.slane %v78, %v271
  %vm273 = vcmask 261120
  %v275 = vsel %vm273, %v257, 0
  %v278 = vsel %vm273, %v258, 0
  %v281 = vsel %vm273, %v259, 0
  %v284 = vsel %vm273, %v260, 0
  %v287 = vsel %vm273, %v261, 0
  %v290 = vsel %vm273, %v262, 0
  %v293 = vsel %vm273, %v263, 0
  %v296 = vsel %vm273, %v264, 0
  %v299 = vsel %vm273, %v265, 0
  %v302 = vsel %vm273, %v266, 0
  %v305 = vsel %vm273, %v267, 0
  %v308 = vsel %vm273, %v268, 0
  %310 = vmatprep.subr.mxu0 0.0
  %311 = vmatpush1.msra.mxu0 0.0
  %312 = vmatprep.subr.mxu0 0.0
  %313 = vmatpush1.msra.mxu0 0.0
  %314 = vmatprep.subr.mxu0 0.0
  %315 = vmatpush1.msra.mxu0 0.0
  %316 = vmatprep.subr.mxu0 0.0
  %317 = vmatpush1.msra.mxu0 0.0
  %318 = vmatprep.subr.mxu0 0.0
  %319 = vmatpush1.msra.mxu0 0.0
  %320 = vmatprep.subr.mxu0 0.0
  %321 = vmatpush1.msra.mxu0 0.0
  %322 = vmatprep.subr.mxu0 0.0
  %323 = vmatpush1.msra.mxu0 0.0
  %324 = vmatprep.subr.mxu0 0.0
  %325 = vmatpush1.msra.mxu0 0.0
  %326 = vmatprep.subr.mxu0 0.0
  %327 = vmatpush1.msra.mxu0 0.0
  %328 = vmatprep.subr.mxu0 0.0
  %329 = vmatpush1.msra.mxu0 0.0
  %330 = vmatprep.subr.mxu0 0.0
  %331 = vmatpush1.msra.mxu0 0.0
  %332 = vmatprep.subr.mxu0 0.0
  %333 = vmatpush1.msra.mxu0 0.0
  %334 = vmatprep.subr.mxu0 0.0
  %335 = vmatpush1.msra.mxu0 %v65
  %336 = vmatprep.subr.mxu0 0.0
  %337 = vmatpush1.msra.mxu0 %v64
  %338 = vmatprep.subr.mxu0 0.0
  %339 = vmatpush1.msra.mxu0 %v63
  %340 = vmatprep.subr.mxu0 0.0
  %341 = vmatpush1.msra.mxu0 %v62
  %342 = vmatprep.subr.mxu0 0.0
  %343 = vmatpush2.msra.mxu0 0.0
  %344 = vmatprep.subr.mxu0 0.0
  %345 = vmatpush2.msra.mxu0 0.0
  %346 = vmatprep.subr.mxu0 0.0
  %347 = vmatpush2.msra.mxu0 0.0
  %348 = vmatprep.subr.mxu0 0.0
  %349 = vmatpush2.msra.mxu0 0.0
  %350 = vmatprep.subr.mxu0 0.0
  %351 = vmatpush2.msra.mxu0 0.0
  %352 = vmatprep.subr.mxu0 0.0
  %353 = vmatpush2.msra.mxu0 0.0
  %354 = vmatprep.subr.mxu0 0.0
  %355 = vmatpush2.msra.mxu0 0.0
  %356 = vmatprep.subr.mxu0 0.0
  %357 = vmatpush2.msra.mxu0 0.0
  %358 = vmatprep.subr.mxu0 0.0
  %359 = vmatpush2.msra.mxu0 0.0
  %360 = vmatprep.subr.mxu0 0.0
  %361 = vmatpush2.msra.mxu0 0.0
  %362 = vmatprep.subr.mxu0 0.0
  %363 = vmatpush2.msra.mxu0 0.0
  %364 = vmatprep.subr.mxu0 0.0
  %365 = vmatpush2.msra.mxu0 0.0
  %366 = vmatprep.subr.mxu0 0.0
  %367 = vmatpush2.msra.mxu0 0.0
  %368 = vmatprep.subr.mxu0 0.0
  %369 = vmatpush2.msra.mxu0 0.0
  %370 = vmatprep.subr.mxu0 0.0
  %371 = vmatpush2.msra.mxu0 0.0
  %372 = vmatprep.subr.mxu0 0.0
  %373 = vmatpush2.msra.mxu0 0.0
  %374 = vmatprep.mubr.f32.mxu0 0.0
  %375 = vmatmul.mubr.f32.gmra.mxu0 %v275
  %v376 = vpop.f32.mrf.mxu0
  %v377 = vadd.f32 %v272, %v376
  %v378 = vpop.f32.mrf.mxu0
  %379 = vmatprep.mubr.f32.mxu0 0.0
  %380 = vmatmul.mubr.f32.gmra.mxu0 %v278
  %v381 = vpop.f32.mrf.mxu0
  %v382 = vadd.f32 %v272, %v381
  %v383 = vpop.f32.mrf.mxu0
  %384 = vmatprep.mubr.f32.mxu0 0.0
  %385 = vmatmul.mubr.f32.gmra.mxu0 %v281
  %v386 = vpop.f32.mrf.mxu0
  %v387 = vadd.f32 %v272, %v386
  %v388 = vpop.f32.mrf.mxu0
  %389 = vmatprep.mubr.f32.mxu0 0.0
  %390 = vmatmul.mubr.f32.gmra.mxu0 %v284
  %v391 = vpop.f32.mrf.mxu0
  %v392 = vadd.f32 %v272, %v391
  %v393 = vpop.f32.mrf.mxu0
  %394 = vmatprep.mubr.f32.mxu0 0.0
  %395 = vmatmul.mubr.f32.gmra.mxu0 %v287
  %v396 = vpop.f32.mrf.mxu0
  %v397 = vadd.f32 %v272, %v396
  %v398 = vpop.f32.mrf.mxu0
  %399 = vmatprep.mubr.f32.mxu0 0.0
  %400 = vmatmul.mubr.f32.gmra.mxu0 %v290
  %v401 = vpop.f32.mrf.mxu0
  %v402 = vadd.f32 %v272, %v401
  %v403 = vpop.f32.mrf.mxu0
  %404 = vmatprep.mubr.f32.mxu0 0.0
  %405 = vmatmul.mubr.f32.gmra.mxu0 %v293
  %v406 = vpop.f32.mrf.mxu0
  %v407 = vadd.f32 %v272, %v406
  %v408 = vpop.f32.mrf.mxu0
  %409 = vmatprep.mubr.f32.mxu0 0.0
  %410 = vmatmul.mubr.f32.gmra.mxu0 %v296
  %v411 = vpop.f32.mrf.mxu0
  %v412 = vadd.f32 %v272, %v411
  %v413 = vpop.f32.mrf.mxu0
  %414 = vmatprep.mubr.f32.mxu0 0.0
  %415 = vmatmul.mubr.f32.gmra.mxu0 %v299
  %v416 = vpop.f32.mrf.mxu0
  %v417 = vadd.f32 %v272, %v416
  %v418 = vpop.f32.mrf.mxu0
  %419 = vmatprep.mubr.f32.mxu0 0.0
  %420 = vmatmul.mubr.f32.gmra.mxu0 %v302
  %v421 = vpop.f32.mrf.mxu0
  %v422 = vadd.f32 %v272, %v421
  %v423 = vpop.f32.mrf.mxu0
  %424 = vmatprep.mubr.f32.mxu0 0.0
  %425 = vmatmul.mubr.f32.gmra.mxu0 %v305
  %v426 = vpop.f32.mrf.mxu0
  %v427 = vadd.f32 %v272, %v426
  %v428 = vpop.f32.mrf.mxu0
  %429 = vmatprep.mubr.f32.mxu0 0.0
  %430 = vmatmul.mubr.f32.gmra.mxu0 %v308
  %v431 = vpop.f32.mrf.mxu0
  %v432 = vadd.f32 %v272, %v431
  %v433 = vpop.f32.mrf.mxu0
  %434 = vdwg.mxu0
  %v435 = vmax.f32 %v377, 0.0
  %v436 = vmax.f32 %v382, 0.0
  %v437 = vmax.f32 %v387, 0.0
  %v438 = vmax.f32 %v392, 0.0
  %v439 = vmax.f32 %v397, 0.0
  %v440 = vmax.f32 %v402, 0.0
  %v441 = vmax.f32 %v407, 0.0
  %v442 = vmax.f32 %v412, 0.0
  %v443 = vmax.f32 %v417, 0.0
  %v444 = vmax.f32 %v422, 0.0
  %v445 = vmax.f32 %v427, 0.0
  %v446 = vmax.f32 %v432, 0.0
  %v447 = vlaneseq
  %v448 = vshrl.u32 %v447, 7
  %v449 = vsub.s32 2, %v448
  %v450 = vrot.slane %v78, %v449
  %v452 = vsel %vm273, %v435, 0
  %v455 = vsel %vm273, %v436, 0
  %v458 = vsel %vm273, %v437, 0
  %v461 = vsel %vm273, %v438, 0
  %v464 = vsel %vm273, %v439, 0
  %v467 = vsel %vm273, %v440, 0
  %v470 = vsel %vm273, %v441, 0
  %v473 = vsel %vm273, %v442, 0
  %v476 = vsel %vm273, %v443, 0
  %v479 = vsel %vm273, %v444, 0
  %v482 = vsel %vm273, %v445, 0
  %v485 = vsel %vm273, %v446, 0
  %487 = vmatprep.subr.mxu0 0.0
  %488 = vmatpush1.msra.mxu0 0.0
  %489 = vmatprep.subr.mxu0 0.0
  %490 = vmatpush1.msra.mxu0 0.0
  %491 = vmatprep.subr.mxu0 0.0
  %492 = vmatpush1.msra.mxu0 0.0
  %493 = vmatprep.subr.mxu0 0.0
  %494 = vmatpush1.msra.mxu0 0.0
  %495 = vmatprep.subr.mxu0 0.0
  %496 = vmatpush1.msra.mxu0 0.0
  %497 = vmatprep.subr.mxu0 0.0
  %498 = vmatpush1.msra.mxu0 0.0
  %499 = vmatprep.subr.mxu0 0.0
  %500 = vmatpush1.msra.mxu0 0.0
  %501 = vmatprep.subr.mxu0 0.0
  %502 = vmatpush1.msra.mxu0 0.0
  %503 = vmatprep.subr.mxu0 0.0
  %504 = vmatpush1.msra.mxu0 0.0
  %505 = vmatprep.subr.mxu0 0.0
  %506 = vmatpush1.msra.mxu0 0.0
  %507 = vmatprep.subr.mxu0 0.0
  %508 = vmatpush1.msra.mxu0 0.0
  %509 = vmatprep.subr.mxu0 0.0
  %510 = vmatpush1.msra.mxu0 0.0
  %511 = vmatprep.subr.mxu0 0.0
  %512 = vmatpush1.msra.mxu0 %v69
  %513 = vmatprep.subr.mxu0 0.0
  %514 = vmatpush1.msra.mxu0 %v68
  %515 = vmatprep.subr.mxu0 0.0
  %516 = vmatpush1.msra.mxu0 %v67
  %517 = vmatprep.subr.mxu0 0.0
  %518 = vmatpush1.msra.mxu0 %v66
  %519 = vmatprep.subr.mxu0 0.0
  %520 = vmatpush2.msra.mxu0 0.0
  %521 = vmatprep.subr.mxu0 0.0
  %522 = vmatpush2.msra.mxu0 0.0
  %523 = vmatprep.subr.mxu0 0.0
  %524 = vmatpush2.msra.mxu0 0.0
  %525 = vmatprep.subr.mxu0 0.0
  %526 = vmatpush2.msra.mxu0 0.0
  %527 = vmatprep.subr.mxu0 0.0
  %528 = vmatpush2.msra.mxu0 0.0
  %529 = vmatprep.subr.mxu0 0.0
  %530 = vmatpush2.msra.mxu0 0.0
  %531 = vmatprep.subr.mxu0 0.0
  %532 = vmatpush2.msra.mxu0 0.0
  %533 = vmatprep.subr.mxu0 0.0
  %534 = vmatpush2.msra.mxu0 0.0
  %535 = vmatprep.subr.mxu0 0.0
  %536 = vmatpush2.msra.mxu0 0.0
  %537 = vmatprep.subr.mxu0 0.0
  %538 = vmatpush2.msra.mxu0 0.0
  %539 = vmatprep.subr.mxu0 0.0
  %540 = vmatpush2.msra.mxu0 0.0
  %541 = vmatprep.subr.mxu0 0.0
  %542 = vmatpush2.msra.mxu0 0.0
  %543 = vmatprep.subr.mxu0 0.0
  %544 = vmatpush2.msra.mxu0 0.0
  %545 = vmatprep.subr.mxu0 0.0
  %546 = vmatpush2.msra.mxu0 0.0
  %547 = vmatprep.subr.mxu0 0.0
  %548 = vmatpush2.msra.mxu0 0.0
  %549 = vmatprep.subr.mxu0 0.0
  %550 = vmatpush2.msra.mxu0 0.0
  %551 = vmatprep.mubr.f32.mxu0 0.0
  %552 = vmatmul.mubr.f32.gmra.mxu0 %v452
  %v553 = vpop.f32.mrf.mxu0
  %v554 = vadd.f32 %v450, %v553
  %v555 = vpop.f32.mrf.mxu0
  %556 = vmatprep.mubr.f32.mxu0 0.0
  %557 = vmatmul.mubr.f32.gmra.mxu0 %v455
  %v558 = vpop.f32.mrf.mxu0
  %v559 = vadd.f32 %v450, %v558
  %v560 = vpop.f32.mrf.mxu0
  %561 = vmatprep.mubr.f32.mxu0 0.0
  %562 = vmatmul.mubr.f32.gmra.mxu0 %v458
  %v563 = vpop.f32.mrf.mxu0
  %v564 = vadd.f32 %v450, %v563
  %v565 = vpop.f32.mrf.mxu0
  %566 = vmatprep.mubr.f32.mxu0 0.0
  %567 = vmatmul.mubr.f32.gmra.mxu0 %v461
  %v568 = vpop.f32.mrf.mxu0
  %v569 = vadd.f32 %v450, %v568
  %v570 = vpop.f32.mrf.mxu0
  %571 = vmatprep.mubr.f32.mxu0 0.0
  %572 = vmatmul.mubr.f32.gmra.mxu0 %v464
  %v573 = vpop.f32.mrf.mxu0
  %v574 = vadd.f32 %v450, %v573
  %v575 = vpop.f32.mrf.mxu0
  %576 = vmatprep.mubr.f32.mxu0 0.0
  %577 = vmatmul.mubr.f32.gmra.mxu0 %v467
  %v578 = vpop.f32.mrf.mxu0
  %v579 = vadd.f32 %v450, %v578
  %v580 = vpop.f32.mrf.mxu0
  %581 = vmatprep.mubr.f32.mxu0 0.0
  %582 = vmatmul.mubr.f32.gmra.mxu0 %v470
  %v583 = vpop.f32.mrf.mxu0
  %v584 = vadd.f32 %v450, %v583
  %v585 = vpop.f32.mrf.mxu0
  %586 = vmatprep.mubr.f32.mxu0 0.0
  %587 = vmatmul.mubr.f32.gmra.mxu0 %v473
  %v588 = vpop.f32.mrf.mxu0
  %v589 = vadd.f32 %v450, %v588
  %v590 = vpop.f32.mrf.mxu0
  %591 = vmatprep.mubr.f32.mxu0 0.0
  %592 = vmatmul.mubr.f32.gmra.mxu0 %v476
  %v593 = vpop.f32.mrf.mxu0
  %v594 = vadd.f32 %v450, %v593
  %v595 = vpop.f32.mrf.mxu0
  %596 = vmatprep.mubr.f32.mxu0 0.0
  %597 = vmatmul.mubr.f32.gmra.mxu0 %v479
  %v598 = vpop.f32.mrf.mxu0
  %v599 = vadd.f32 %v450, %v598
  %v600 = vpop.f32.mrf.mxu0
  %601 = vmatprep.mubr.f32.mxu0 0.0
  %602 = vmatmul.mubr.f32.gmra.mxu0 %v482
  %v603 = vpop.f32.mrf.mxu0
  %v604 = vadd.f32 %v450, %v603
  %v605 = vpop.f32.mrf.mxu0
  %606 = vmatprep.mubr.f32.mxu0 0.0
  %607 = vmatmul.mubr.f32.gmra.mxu0 %v485
  %v608 = vpop.f32.mrf.mxu0
  %v609 = vadd.f32 %v450, %v608
  %v610 = vpop.f32.mrf.mxu0
  %611 = vdwg.mxu0
  %v612 = vmax.f32 %v554, 0.0
  %v613 = vmax.f32 %v559, 0.0
  %v614 = vmax.f32 %v564, 0.0
  %v615 = vmax.f32 %v569, 0.0
  %v616 = vmax.f32 %v574, 0.0
  %v617 = vmax.f32 %v579, 0.0
  %v618 = vmax.f32 %v584, 0.0
  %v619 = vmax.f32 %v589, 0.0
  %v620 = vmax.f32 %v594, 0.0
  %v621 = vmax.f32 %v599, 0.0
  %v622 = vmax.f32 %v604, 0.0
  %v623 = vmax.f32 %v609, 0.0
  %v624 = vld [vmem:[%s3] sm:$0xff]
  %v625 = vld [vmem:[%s3 + $0x8] sm:$0xff]
  %v626 = vld [vmem:[%s3 + $0x10] sm:$0xff]
  %v627 = vld [vmem:[%s3 + $0x18] sm:$0xff]
  %v628 = vld [vmem:[%s3 + $0x20] sm:$0xff]
  %v629 = vld [vmem:[%s3 + $0x28] sm:$0xff]
  %v630 = vld [vmem:[%s3 + $0x30] sm:$0xff]
  %v631 = vld [vmem:[%s3 + $0x38] sm:$0x7f]
  %v633 = vsel %vm128, %v631, 0
  %635 = vmatprep.subr.mxu0 0.0
  %636 = vmatpush1.msra.mxu0 0.0
  %637 = vmatprep.subr.mxu0 0.0
  %638 = vmatpush1.msra.mxu0 0.0
  %639 = vmatprep.subr.mxu0 0.0
  %640 = vmatpush1.msra.mxu0 0.0
  %641 = vmatprep.subr.mxu0 0.0
  %642 = vmatpush1.msra.mxu0 0.0
  %643 = vmatprep.subr.mxu0 0.0
  %644 = vmatpush1.msra.mxu0 0.0
  %645 = vmatprep.subr.mxu0 0.0
  %646 = vmatpush1.msra.mxu0 0.0
  %647 = vmatprep.subr.mxu0 0.0
  %648 = vmatpush1.msra.mxu0 0.0
  %649 = vmatprep.subr.mxu0 0.0
  %650 = vmatpush1.msra.mxu0 0.0
  %651 = vmatprep.subr.mxu0 0.0
  %652 = vmatpush1.msra.mxu0 %v633
  %653 = vmatprep.subr.mxu0 0.0
  %654 = vmatpush1.msra.mxu0 %v630
  %655 = vmatprep.subr.mxu0 0.0
  %656 = vmatpush1.msra.mxu0 %v629
  %657 = vmatprep.subr.mxu0 0.0
  %658 = vmatpush1.msra.mxu0 %v628
  %659 = vmatprep.subr.mxu0 0.0
  %660 = vmatpush1.msra.mxu0 %v627
  %661 = vmatprep.subr.mxu0 0.0
  %662 = vmatpush1.msra.mxu0 %v626
  %663 = vmatprep.subr.mxu0 0.0
  %664 = vmatpush1.msra.mxu0 %v625
  %665 = vmatprep.subr.mxu0 0.0
  %666 = vmatpush1.msra.mxu0 %v624
  %667 = vmatprep.subr.mxu0 0.0
  %668 = vmatpush2.msra.mxu0 0.0
  %669 = vmatprep.subr.mxu0 0.0
  %670 = vmatpush2.msra.mxu0 0.0
  %671 = vmatprep.subr.mxu0 0.0
  %672 = vmatpush2.msra.mxu0 0.0
  %673 = vmatprep.subr.mxu0 0.0
  %674 = vmatpush2.msra.mxu0 0.0
  %675 = vmatprep.subr.mxu0 0.0
  %676 = vmatpush2.msra.mxu0 0.0
  %677 = vmatprep.subr.mxu0 0.0
  %678 = vmatpush2.msra.mxu0 0.0
  %679 = vmatprep.subr.mxu0 0.0
  %680 = vmatpush2.msra.mxu0 0.0
  %681 = vmatprep.subr.mxu0 0.0
  %682 = vmatpush2.msra.mxu0 0.0
  %683 = vmatprep.subr.mxu0 0.0
  %684 = vmatpush2.msra.mxu0 0.0
  %685 = vmatprep.subr.mxu0 0.0
  %686 = vmatpush2.msra.mxu0 0.0
  %687 = vmatprep.subr.mxu0 0.0
  %688 = vmatpush2.msra.mxu0 0.0
  %689 = vmatprep.subr.mxu0 0.0
  %690 = vmatpush2.msra.mxu0 0.0
  %691 = vmatprep.subr.mxu0 0.0
  %692 = vmatpush2.msra.mxu0 0.0
  %693 = vmatprep.subr.mxu0 0.0
  %694 = vmatpush2.msra.mxu0 0.0
  %695 = vmatprep.subr.mxu0 0.0
  %696 = vmatpush2.msra.mxu0 0.0
  %697 = vmatprep.subr.mxu0 0.0
  %698 = vmatpush2.msra.mxu0 0.0
  %699 = vmatprep.mubr.f32.mxu0 0.0
  %700 = vmatmul.mubr.f32.gmra.mxu0 %v93
  %v701 = vpop.f32.mrf.mxu0
  %v702 = vadd.f32 0.0, %v701
  %v703 = vpop.f32.mrf.mxu0
  %704 = vmatprep.mubr.f32.mxu0 0.0
  %705 = vmatmul.mubr.f32.gmra.mxu0 %v96
  %v706 = vpop.f32.mrf.mxu0
  %v707 = vadd.f32 0.0, %v706
  %v708 = vpop.f32.mrf.mxu0
  %709 = vmatprep.mubr.f32.mxu0 0.0
  %710 = vmatmul.mubr.f32.gmra.mxu0 %v99
  %v711 = vpop.f32.mrf.mxu0
  %v712 = vadd.f32 0.0, %v711
  %v713 = vpop.f32.mrf.mxu0
  %714 = vmatprep.mubr.f32.mxu0 0.0
  %715 = vmatmul.mubr.f32.gmra.mxu0 %v102
  %v716 = vpop.f32.mrf.mxu0
  %v717 = vadd.f32 0.0, %v716
  %v718 = vpop.f32.mrf.mxu0
  %719 = vmatprep.mubr.f32.mxu0 0.0
  %720 = vmatmul.mubr.f32.gmra.mxu0 %v105
  %v721 = vpop.f32.mrf.mxu0
  %v722 = vadd.f32 0.0, %v721
  %v723 = vpop.f32.mrf.mxu0
  %724 = vmatprep.mubr.f32.mxu0 0.0
  %725 = vmatmul.mubr.f32.gmra.mxu0 %v108
  %v726 = vpop.f32.mrf.mxu0
  %v727 = vadd.f32 0.0, %v726
  %v728 = vpop.f32.mrf.mxu0
  %729 = vmatprep.mubr.f32.mxu0 0.0
  %730 = vmatmul.mubr.f32.gmra.mxu0 %v111
  %v731 = vpop.f32.mrf.mxu0
  %v732 = vadd.f32 0.0, %v731
  %v733 = vpop.f32.mrf.mxu0
  %734 = vmatprep.mubr.f32.mxu0 0.0
  %735 = vmatmul.mubr.f32.gmra.mxu0 %v114
  %v736 = vpop.f32.mrf.mxu0
  %v737 = vadd.f32 0.0, %v736
  %v738 = vpop.f32.mrf.mxu0
  %739 = vmatprep.mubr.f32.mxu0 0.0
  %740 = vmatmul.mubr.f32.gmra.mxu0 %v117
  %v741 = vpop.f32.mrf.mxu0
  %v742 = vadd.f32 0.0, %v741
  %v743 = vpop.f32.mrf.mxu0
  %744 = vmatprep.mubr.f32.mxu0 0.0
  %745 = vmatmul.mubr.f32.gmra.mxu0 %v120
  %v746 = vpop.f32.mrf.mxu0
  %v747 = vadd.f32 0.0, %v746
  %v748 = vpop.f32.mrf.mxu0
  %749 = vmatprep.mubr.f32.mxu0 0.0
  %750 = vmatmul.mubr.f32.gmra.mxu0 %v123
  %v751 = vpop.f32.mrf.mxu0
  %v752 = vadd.f32 0.0, %v751
  %v753 = vpop.f32.mrf.mxu0
  %754 = vmatprep.mubr.f32.mxu0 0.0
  %755 = vmatmul.mubr.f32.gmra.mxu0 %v126
  %v756 = vpop.f32.mrf.mxu0
  %v757 = vadd.f32 0.0, %v756
  %v758 = vpop.f32.mrf.mxu0
  %759 = vdwg.mxu0
  %v761 = vsel %vm273, %v612, 0
  %v764 = vsel %vm273, %v613, 0
  %v767 = vsel %vm273, %v614, 0
  %v770 = vsel %vm273, %v615, 0
  %v773 = vsel %vm273, %v616, 0
  %v776 = vsel %vm273, %v617, 0
  %v779 = vsel %vm273, %v618, 0
  %v782 = vsel %vm273, %v619, 0
  %v785 = vsel %vm273, %v620, 0
  %v788 = vsel %vm273, %v621, 0
  %v791 = vsel %vm273, %v622, 0
  %v794 = vsel %vm273, %v623, 0
  %796 = vmatprep.subr.mxu0 0.0
  %797 = vmatpush1.msra.mxu0 0.0
  %798 = vmatprep.subr.mxu0 0.0
  %799 = vmatpush1.msra.mxu0 0.0
  %800 = vmatprep.subr.mxu0 0.0
  %801 = vmatpush1.msra.mxu0 0.0
  %802 = vmatprep.subr.mxu0 0.0
  %803 = vmatpush1.msra.mxu0 0.0
  %804 = vmatprep.subr.mxu0 0.0
  %805 = vmatpush1.msra.mxu0 0.0
  %806 = vmatprep.subr.mxu0 0.0
  %807 = vmatpush1.msra.mxu0 0.0
  %808 = vmatprep.subr.mxu0 0.0
  %809 = vmatpush1.msra.mxu0 0.0
  %810 = vmatprep.subr.mxu0 0.0
  %811 = vmatpush1.msra.mxu0 0.0
  %812 = vmatprep.subr.mxu0 0.0
  %813 = vmatpush1.msra.mxu0 0.0
  %814 = vmatprep.subr.mxu0 0.0
  %815 = vmatpush1.msra.mxu0 0.0
  %816 = vmatprep.subr.mxu0 0.0
  %817 = vmatpush1.msra.mxu0 0.0
  %818 = vmatprep.subr.mxu0 0.0
  %819 = vmatpush1.msra.mxu0 0.0
  %820 = vmatprep.subr.mxu0 0.0
  %821 = vmatpush1.msra.mxu0 %v73
  %822 = vmatprep.subr.mxu0 0.0
  %823 = vmatpush1.msra.mxu0 %v72
  %824 = vmatprep.subr.mxu0 0.0
  %825 = vmatpush1.msra.mxu0 %v71
  %826 = vmatprep.subr.mxu0 0.0
  %827 = vmatpush1.msra.mxu0 %v70
  %828 = vmatprep.subr.mxu0 0.0
  %829 = vmatpush2.msra.mxu0 0.0
  %830 = vmatprep.subr.mxu0 0.0
  %831 = vmatpush2.msra.mxu0 0.0
  %832 = vmatprep.subr.mxu0 0.0
  %833 = vmatpush2.msra.mxu0 0.0
  %834 = vmatprep.subr.mxu0 0.0
  %835 = vmatpush2.msra.mxu0 0.0
  %836 = vmatprep.subr.mxu0 0.0
  %837 = vmatpush2.msra.mxu0 0.0
  %838 = vmatprep.subr.mxu0 0.0
  %839 = vmatpush2.msra.mxu0 0.0
  %840 = vmatprep.subr.mxu0 0.0
  %841 = vmatpush2.msra.mxu0 0.0
  %842 = vmatprep.subr.mxu0 0.0
  %843 = vmatpush2.msra.mxu0 0.0
  %844 = vmatprep.subr.mxu0 0.0
  %845 = vmatpush2.msra.mxu0 0.0
  %846 = vmatprep.subr.mxu0 0.0
  %847 = vmatpush2.msra.mxu0 0.0
  %848 = vmatprep.subr.mxu0 0.0
  %849 = vmatpush2.msra.mxu0 0.0
  %850 = vmatprep.subr.mxu0 0.0
  %851 = vmatpush2.msra.mxu0 0.0
  %852 = vmatprep.subr.mxu0 0.0
  %853 = vmatpush2.msra.mxu0 0.0
  %854 = vmatprep.subr.mxu0 0.0
  %855 = vmatpush2.msra.mxu0 0.0
  %856 = vmatprep.subr.mxu0 0.0
  %857 = vmatpush2.msra.mxu0 0.0
  %858 = vmatprep.subr.mxu0 0.0
  %859 = vmatpush2.msra.mxu0 0.0
  %860 = vmatprep.mubr.f32.mxu0 0.0
  %861 = vmatmul.mubr.f32.gmra.mxu0 %v761
  %v862 = vpop.f32.mrf.mxu0
  %v863 = vadd.f32 %v702, %v862
  %v864 = vpop.f32.mrf.mxu0
  %865 = vmatprep.mubr.f32.mxu0 0.0
  %866 = vmatmul.mubr.f32.gmra.mxu0 %v764
  %v867 = vpop.f32.mrf.mxu0
  %v868 = vadd.f32 %v707, %v867
  %v869 = vpop.f32.mrf.mxu0
  %870 = vmatprep.mubr.f32.mxu0 0.0
  %871 = vmatmul.mubr.f32.gmra.mxu0 %v767
  %v872 = vpop.f32.mrf.mxu0
  %v873 = vadd.f32 %v712, %v872
  %v874 = vpop.f32.mrf.mxu0
  %875 = vmatprep.mubr.f32.mxu0 0.0
  %876 = vmatmul.mubr.f32.gmra.mxu0 %v770
  %v877 = vpop.f32.mrf.mxu0
  %v878 = vadd.f32 %v717, %v877
  %v879 = vpop.f32.mrf.mxu0
  %880 = vmatprep.mubr.f32.mxu0 0.0
  %881 = vmatmul.mubr.f32.gmra.mxu0 %v773
  %v882 = vpop.f32.mrf.mxu0
  %v883 = vadd.f32 %v722, %v882
  %v884 = vpop.f32.mrf.mxu0
  %885 = vmatprep.mubr.f32.mxu0 0.0
  %886 = vmatmul.mubr.f32.gmra.mxu0 %v776
  %v887 = vpop.f32.mrf.mxu0
  %v888 = vadd.f32 %v727, %v887
  %v889 = vpop.f32.mrf.mxu0
  %890 = vmatprep.mubr.f32.mxu0 0.0
  %891 = vmatmul.mubr.f32.gmra.mxu0 %v779
  %v892 = vpop.f32.mrf.mxu0
  %v893 = vadd.f32 %v732, %v892
  %v894 = vpop.f32.mrf.mxu0
  %895 = vmatprep.mubr.f32.mxu0 0.0
  %896 = vmatmul.mubr.f32.gmra.mxu0 %v782
  %v897 = vpop.f32.mrf.mxu0
  %v898 = vadd.f32 %v737, %v897
  %v899 = vpop.f32.mrf.mxu0
  %900 = vmatprep.mubr.f32.mxu0 0.0
  %901 = vmatmul.mubr.f32.gmra.mxu0 %v785
  %v902 = vpop.f32.mrf.mxu0
  %v903 = vadd.f32 %v742, %v902
  %v904 = vpop.f32.mrf.mxu0
  %905 = vmatprep.mubr.f32.mxu0 0.0
  %906 = vmatmul.mubr.f32.gmra.mxu0 %v788
  %v907 = vpop.f32.mrf.mxu0
  %v908 = vadd.f32 %v747, %v907
  %v909 = vpop.f32.mrf.mxu0
  %910 = vmatprep.mubr.f32.mxu0 0.0
  %911 = vmatmul.mubr.f32.gmra.mxu0 %v791
  %v912 = vpop.f32.mrf.mxu0
  %v913 = vadd.f32 %v752, %v912
  %v914 = vpop.f32.mrf.mxu0
  %915 = vmatprep.mubr.f32.mxu0 0.0
  %916 = vmatmul.mubr.f32.gmra.mxu0 %v794
  %v917 = vpop.f32.mrf.mxu0
  %v918 = vadd.f32 %v757, %v917
  %v919 = vpop.f32.mrf.mxu0
  %920 = vdwg.mxu0
  %v921 = vlaneseq
  %v922 = vshrl.u32 %v921, 7
  %v923 = vsub.s32 3, %v922
  %v924 = vrot.slane %v78, %v923
  %v925 = vadd.f32 %v863, %v924
  %v926 = vadd.f32 %v868, %v924
  %v927 = vadd.f32 %v873, %v924
  %v928 = vadd.f32 %v878, %v924
  %v929 = vadd.f32 %v883, %v924
  %v930 = vadd.f32 %v888, %v924
  %v931 = vadd.f32 %v893, %v924
  %v932 = vadd.f32 %v898, %v924
  %v933 = vadd.f32 %v903, %v924
  %v934 = vadd.f32 %v908, %v924
  %v935 = vadd.f32 %v913, %v924
  %v936 = vadd.f32 %v918, %v924
  %v937 = vmax.f32 %v925, 0.0
  %v938 = vmax.f32 %v926, 0.0
  %v939 = vmax.f32 %v927, 0.0
  %v940 = vmax.f32 %v928, 0.0
  %v941 = vmax.f32 %v929, 0.0
  %v942 = vmax.f32 %v930, 0.0
  %v943 = vmax.f32 %v931, 0.0
  %v944 = vmax.f32 %v932, 0.0
  %v945 = vmax.f32 %v933, 0.0
  %v946 = vmax.f32 %v934, 0.0
  %v947 = vmax.f32 %v935, 0.0
  %v948 = vmax.f32 %v936, 0.0
  %v949 = vlaneseq
  %v950 = vshrl.u32 %v949, 7
  %v951 = vsub.s32 4, %v950
  %v952 = vrot.slane %v78, %v951
  %v954 = vsel %vm273, %v937, 0
  %v957 = vsel %vm273, %v938, 0
  %v960 = vsel %vm273, %v939, 0
  %v963 = vsel %vm273, %v940, 0
  %v966 = vsel %vm273, %v941, 0
  %v969 = vsel %vm273, %v942, 0
  %v972 = vsel %vm273, %v943, 0
  %v975 = vsel %vm273, %v944, 0
  %v978 = vsel %vm273, %v945, 0
  %v981 = vsel %vm273, %v946, 0
  %v984 = vsel %vm273, %v947, 0
  %v987 = vsel %vm273, %v948, 0
  %989 = vmatprep.subr.mxu0 0.0
  %990 = vmatpush1.msra.mxu0 0.0
  %991 = vmatprep.subr.mxu0 0.0
  %992 = vmatpush1.msra.mxu0 0.0
  %993 = vmatprep.subr.mxu0 0.0
  %994 = vmatpush1.msra.mxu0 0.0
  %995 = vmatprep.subr.mxu0 0.0
  %996 = vmatpush1.msra.mxu0 0.0
  %997 = vmatprep.subr.mxu0 0.0
  %998 = vmatpush1.msra.mxu0 0.0
  %999 = vmatprep.subr.mxu0 0.0
  %1000 = vmatpush1.msra.mxu0 0.0
  %1001 = vmatprep.subr.mxu0 0.0
  %1002 = vmatpush1.msra.mxu0 0.0
  %1003 = vmatprep.subr.mxu0 0.0
  %1004 = vmatpush1.msra.mxu0 0.0
  %1005 = vmatprep.subr.mxu0 0.0
  %1006 = vmatpush1.msra.mxu0 0.0
  %1007 = vmatprep.subr.mxu0 0.0
  %1008 = vmatpush1.msra.mxu0 0.0
  %1009 = vmatprep.subr.mxu0 0.0
  %1010 = vmatpush1.msra.mxu0 0.0
  %1011 = vmatprep.subr.mxu0 0.0
  %1012 = vmatpush1.msra.mxu0 0.0
  %1013 = vmatprep.subr.mxu0 0.0
  %1014 = vmatpush1.msra.mxu0 %v77
  %1015 = vmatprep.subr.mxu0 0.0
  %1016 = vmatpush1.msra.mxu0 %v76
  %1017 = vmatprep.subr.mxu0 0.0
  %1018 = vmatpush1.msra.mxu0 %v75
  %1019 = vmatprep.subr.mxu0 0.0
  %1020 = vmatpush1.msra.mxu0 %v74
  %1021 = vmatprep.subr.mxu0 0.0
  %1022 = vmatpush2.msra.mxu0 0.0
  %1023 = vmatprep.subr.mxu0 0.0
  %1024 = vmatpush2.msra.mxu0 0.0
  %1025 = vmatprep.subr.mxu0 0.0
  %1026 = vmatpush2.msra.mxu0 0.0
  %1027 = vmatprep.subr.mxu0 0.0
  %1028 = vmatpush2.msra.mxu0 0.0
  %1029 = vmatprep.subr.mxu0 0.0
  %1030 = vmatpush2.msra.mxu0 0.0
  %1031 = vmatprep.subr.mxu0 0.0
  %1032 = vmatpush2.msra.mxu0 0.0
  %1033 = vmatprep.subr.mxu0 0.0
  %1034 = vmatpush2.msra.mxu0 0.0
  %1035 = vmatprep.subr.mxu0 0.0
  %1036 = vmatpush2.msra.mxu0 0.0
  %1037 = vmatprep.subr.mxu0 0.0
  %1038 = vmatpush2.msra.mxu0 0.0
  %1039 = vmatprep.subr.mxu0 0.0
  %1040 = vmatpush2.msra.mxu0 0.0
  %1041 = vmatprep.subr.mxu0 0.0
  %1042 = vmatpush2.msra.mxu0 0.0
  %1043 = vmatprep.subr.mxu0 0.0
  %1044 = vmatpush2.msra.mxu0 0.0
  %1045 = vmatprep.subr.mxu0 0.0
  %1046 = vmatpush2.msra.mxu0 0.0
  %1047 = vmatprep.subr.mxu0 0.0
  %1048 = vmatpush2.msra.mxu0 0.0
  %1049 = vmatprep.subr.mxu0 0.0
  %1050 = vmatpush2.msra.mxu0 0.0
  %1051 = vmatprep.subr.mxu0 0.0
  %1052 = vmatpush2.msra.mxu0 0.0
  %1053 = vmatprep.mubr.f32.mxu0 0.0
  %1054 = vmatmul.mubr.f32.gmra.mxu0 %v954
  %v1055 = vpop.f32.mrf.mxu0
  %v1056 = vadd.f32 %v952, %v1055
  %v1057 = vpop.f32.mrf.mxu0
  %1058 = vmatprep.mubr.f32.mxu0 0.0
  %1059 = vmatmul.mubr.f32.gmra.mxu0 %v957
  %v1060 = vpop.f32.mrf.mxu0
  %v1061 = vadd.f32 %v952, %v1060
  %v1062 = vpop.f32.mrf.mxu0
  %1063 = vmatprep.mubr.f32.mxu0 0.0
  %1064 = vmatmul.mubr.f32.gmra.mxu0 %v960
  %v1065 = vpop.f32.mrf.mxu0
  %v1066 = vadd.f32 %v952, %v1065
  %v1067 = vpop.f32.mrf.mxu0
  %1068 = vmatprep.mubr.f32.mxu0 0.0
  %1069 = vmatmul.mubr.f32.gmra.mxu0 %v963
  %v1070 = vpop.f32.mrf.mxu0
  %v1071 = vadd.f32 %v952, %v1070
  %v1072 = vpop.f32.mrf.mxu0
  %1073 = vmatprep.mubr.f32.mxu0 0.0
  %1074 = vmatmul.mubr.f32.gmra.mxu0 %v966
  %v1075 = vpop.f32.mrf.mxu0
  %v1076 = vadd.f32 %v952, %v1075
  %v1077 = vpop.f32.mrf.mxu0
  %1078 = vmatprep.mubr.f32.mxu0 0.0
  %1079 = vmatmul.mubr.f32.gmra.mxu0 %v969
  %v1080 = vpop.f32.mrf.mxu0
  %v1081 = vadd.f32 %v952, %v1080
  %v1082 = vpop.f32.mrf.mxu0
  %1083 = vmatprep.mubr.f32.mxu0 0.0
  %1084 = vmatmul.mubr.f32.gmra.mxu0 %v972
  %v1085 = vpop.f32.mrf.mxu0
  %v1086 = vadd.f32 %v952, %v1085
  %v1087 = vpop.f32.mrf.mxu0
  %1088 = vmatprep.mubr.f32.mxu0 0.0
  %1089 = vmatmul.mubr.f32.gmra.mxu0 %v975
  %v1090 = vpop.f32.mrf.mxu0
  %v1091 = vadd.f32 %v952, %v1090
  %v1092 = vpop.f32.mrf.mxu0
  %1093 = vmatprep.mubr.f32.mxu0 0.0
  %1094 = vmatmul.mubr.f32.gmra.mxu0 %v978
  %v1095 = vpop.f32.mrf.mxu0
  %v1096 = vadd.f32 %v952, %v1095
  %v1097 = vpop.f32.mrf.mxu0
  %1098 = vmatprep.mubr.f32.mxu0 0.0
  %1099 = vmatmul.mubr.f32.gmra.mxu0 %v981
  %v1100 = vpop.f32.mrf.mxu0
  %v1101 = vadd.f32 %v952, %v1100
  %v1102 = vpop.f32.mrf.mxu0
  %1103 = vmatprep.mubr.f32.mxu0 0.0
  %1104 = vmatmul.mubr.f32.gmra.mxu0 %v984
  %v1105 = vpop.f32.mrf.mxu0
  %v1106 = vadd.f32 %v952, %v1105
  %v1107 = vpop.f32.mrf.mxu0
  %1108 = vmatprep.mubr.f32.mxu0 0.0
  %1109 = vmatmul.mubr.f32.gmra.mxu0 %v987
  %v1110 = vpop.f32.mrf.mxu0
  %v1111 = vadd.f32 %v952, %v1110
  %v1112 = vpop.f32.mrf.mxu0
  %1113 = vdwg.mxu0
  %v1114 = vld [vmem:[%s5] sm:$0xff]
  %v1115 = vld [vmem:[%s5 + $0x8] sm:$0xff]
  %v1116 = vld [vmem:[%s5 + $0x10] sm:$0xff]
  %v1117 = vld [vmem:[%s5 + $0x18] sm:$0xff]
  %v1118 = vld [vmem:[%s6] sm:$0xff]
  %v1119 = vld [vmem:[%s6 + $0x8] sm:$0x7f]
  %vm1120 = vcmask 121856
  %v1122 = vsel %vm1120, %v50, 0
  %v1125 = vsel %vm1120, %v51, 0
  %v1128 = vsel %vm1120, %v52, 0
  %v1131 = vsel %vm1120, %v53, 0
  %v1134 = vsel %vm1120, %v54, 0
  %v1137 = vsel %vm1120, %v55, 0
  %v1140 = vsel %vm1120, %v56, 0
  %v1143 = vsel %vm1120, %v57, 0
  %v1146 = vsel %vm1120, %v58, 0
  %v1149 = vsel %vm1120, %v59, 0
  %v1152 = vsel %vm1120, %v60, 0
  %v1155 = vsel %vm1120, %v61, 0
  %v1158 = vsel %vm128, %v1119, 0
  %1160 = vmatprep.subr.mxu0 0.0
  %1161 = vmatpush1.msra.mxu0 0.0
  %1162 = vmatprep.subr.mxu0 0.0
  %1163 = vmatpush1.msra.mxu0 0.0
  %1164 = vmatprep.subr.mxu0 0.0
  %1165 = vmatpush1.msra.mxu0 0.0
  %1166 = vmatprep.subr.mxu0 0.0
  %1167 = vmatpush1.msra.mxu0 0.0
  %1168 = vmatprep.subr.mxu0 0.0
  %1169 = vmatpush1.msra.mxu0 0.0
  %1170 = vmatprep.subr.mxu0 0.0
  %1171 = vmatpush1.msra.mxu0 0.0
  %1172 = vmatprep.subr.mxu0 0.0
  %1173 = vmatpush1.msra.mxu0 0.0
  %1174 = vmatprep.subr.mxu0 0.0
  %1175 = vmatpush1.msra.mxu0 0.0
  %1176 = vmatprep.subr.mxu0 0.0
  %1177 = vmatpush1.msra.mxu0 0.0
  %1178 = vmatprep.subr.mxu0 0.0
  %1179 = vmatpush1.msra.mxu0 0.0
  %1180 = vmatprep.subr.mxu0 0.0
  %1181 = vmatpush1.msra.mxu0 0.0
  %1182 = vmatprep.subr.mxu0 0.0
  %1183 = vmatpush1.msra.mxu0 0.0
  %1184 = vmatprep.subr.mxu0 0.0
  %1185 = vmatpush1.msra.mxu0 0.0
  %1186 = vmatprep.subr.mxu0 0.0
  %1187 = vmatpush1.msra.mxu0 0.0
  %1188 = vmatprep.subr.mxu0 0.0
  %1189 = vmatpush1.msra.mxu0 %v1158
  %1190 = vmatprep.subr.mxu0 0.0
  %1191 = vmatpush1.msra.mxu0 %v1118
  %1192 = vmatprep.subr.mxu0 0.0
  %1193 = vmatpush2.msra.mxu0 0.0
  %1194 = vmatprep.subr.mxu0 0.0
  %1195 = vmatpush2.msra.mxu0 0.0
  %1196 = vmatprep.subr.mxu0 0.0
  %1197 = vmatpush2.msra.mxu0 0.0
  %1198 = vmatprep.subr.mxu0 0.0
  %1199 = vmatpush2.msra.mxu0 0.0
  %1200 = vmatprep.subr.mxu0 0.0
  %1201 = vmatpush2.msra.mxu0 0.0
  %1202 = vmatprep.subr.mxu0 0.0
  %1203 = vmatpush2.msra.mxu0 0.0
  %1204 = vmatprep.subr.mxu0 0.0
  %1205 = vmatpush2.msra.mxu0 0.0
  %1206 = vmatprep.subr.mxu0 0.0
  %1207 = vmatpush2.msra.mxu0 0.0
  %1208 = vmatprep.subr.mxu0 0.0
  %1209 = vmatpush2.msra.mxu0 0.0
  %1210 = vmatprep.subr.mxu0 0.0
  %1211 = vmatpush2.msra.mxu0 0.0
  %1212 = vmatprep.subr.mxu0 0.0
  %1213 = vmatpush2.msra.mxu0 0.0
  %1214 = vmatprep.subr.mxu0 0.0
  %1215 = vmatpush2.msra.mxu0 0.0
  %1216 = vmatprep.subr.mxu0 0.0
  %1217 = vmatpush2.msra.mxu0 0.0
  %1218 = vmatprep.subr.mxu0 0.0
  %1219 = vmatpush2.msra.mxu0 0.0
  %1220 = vmatprep.subr.mxu0 0.0
  %1221 = vmatpush2.msra.mxu0 0.0
  %1222 = vmatprep.subr.mxu0 0.0
  %1223 = vmatpush2.msra.mxu0 0.0
  %1224 = vmatprep.mubr.f32.mxu0 0.0
  %1225 = vmatmul.mubr.f32.gmra.mxu0 %v1122
  %v1226 = vpop.f32.mrf.mxu0
  %v1227 = vadd.f32 0.0, %v1226
  %v1228 = vpop.f32.mrf.mxu0
  %1229 = vmatprep.mubr.f32.mxu0 0.0
  %1230 = vmatmul.mubr.f32.gmra.mxu0 %v1125
  %v1231 = vpop.f32.mrf.mxu0
  %v1232 = vadd.f32 0.0, %v1231
  %v1233 = vpop.f32.mrf.mxu0
  %1234 = vmatprep.mubr.f32.mxu0 0.0
  %1235 = vmatmul.mubr.f32.gmra.mxu0 %v1128
  %v1236 = vpop.f32.mrf.mxu0
  %v1237 = vadd.f32 0.0, %v1236
  %v1238 = vpop.f32.mrf.mxu0
  %1239 = vmatprep.mubr.f32.mxu0 0.0
  %1240 = vmatmul.mubr.f32.gmra.mxu0 %v1131
  %v1241 = vpop.f32.mrf.mxu0
  %v1242 = vadd.f32 0.0, %v1241
  %v1243 = vpop.f32.mrf.mxu0
  %1244 = vmatprep.mubr.f32.mxu0 0.0
  %1245 = vmatmul.mubr.f32.gmra.mxu0 %v1134
  %v1246 = vpop.f32.mrf.mxu0
  %v1247 = vadd.f32 0.0, %v1246
  %v1248 = vpop.f32.mrf.mxu0
  %1249 = vmatprep.mubr.f32.mxu0 0.0
  %1250 = vmatmul.mubr.f32.gmra.mxu0 %v1137
  %v1251 = vpop.f32.mrf.mxu0
  %v1252 = vadd.f32 0.0, %v1251
  %v1253 = vpop.f32.mrf.mxu0
  %1254 = vmatprep.mubr.f32.mxu0 0.0
  %1255 = vmatmul.mubr.f32.gmra.mxu0 %v1140
  %v1256 = vpop.f32.mrf.mxu0
  %v1257 = vadd.f32 0.0, %v1256
  %v1258 = vpop.f32.mrf.mxu0
  %1259 = vmatprep.mubr.f32.mxu0 0.0
  %1260 = vmatmul.mubr.f32.gmra.mxu0 %v1143
  %v1261 = vpop.f32.mrf.mxu0
  %v1262 = vadd.f32 0.0, %v1261
  %v1263 = vpop.f32.mrf.mxu0
  %1264 = vmatprep.mubr.f32.mxu0 0.0
  %1265 = vmatmul.mubr.f32.gmra.mxu0 %v1146
  %v1266 = vpop.f32.mrf.mxu0
  %v1267 = vadd.f32 0.0, %v1266
  %v1268 = vpop.f32.mrf.mxu0
  %1269 = vmatprep.mubr.f32.mxu0 0.0
  %1270 = vmatmul.mubr.f32.gmra.mxu0 %v1149
  %v1271 = vpop.f32.mrf.mxu0
  %v1272 = vadd.f32 0.0, %v1271
  %v1273 = vpop.f32.mrf.mxu0
  %1274 = vmatprep.mubr.f32.mxu0 0.0
  %1275 = vmatmul.mubr.f32.gmra.mxu0 %v1152
  %v1276 = vpop.f32.mrf.mxu0
  %v1277 = vadd.f32 0.0, %v1276
  %v1278 = vpop.f32.mrf.mxu0
  %1279 = vmatprep.mubr.f32.mxu0 0.0
  %1280 = vmatmul.mubr.f32.gmra.mxu0 %v1155
  %v1281 = vpop.f32.mrf.mxu0
  %v1282 = vadd.f32 0.0, %v1281
  %v1283 = vpop.f32.mrf.mxu0
  %1284 = vdwg.mxu0
  %v1286 = vsel %vm273, %v1056, 0
  %v1289 = vsel %vm273, %v1061, 0
  %v1292 = vsel %vm273, %v1066, 0
  %v1295 = vsel %vm273, %v1071, 0
  %v1298 = vsel %vm273, %v1076, 0
  %v1301 = vsel %vm273, %v1081, 0
  %v1304 = vsel %vm273, %v1086, 0
  %v1307 = vsel %vm273, %v1091, 0
  %v1310 = vsel %vm273, %v1096, 0
  %v1313 = vsel %vm273, %v1101, 0
  %v1316 = vsel %vm273, %v1106, 0
  %v1319 = vsel %vm273, %v1111, 0
  %1321 = vmatprep.subr.mxu0 0.0
  %1322 = vmatpush1.msra.mxu0 0.0
  %1323 = vmatprep.subr.mxu0 0.0
  %1324 = vmatpush1.msra.mxu0 0.0
  %1325 = vmatprep.subr.mxu0 0.0
  %1326 = vmatpush1.msra.mxu0 0.0
  %1327 = vmatprep.subr.mxu0 0.0
  %1328 = vmatpush1.msra.mxu0 0.0
  %1329 = vmatprep.subr.mxu0 0.0
  %1330 = vmatpush1.msra.mxu0 0.0
  %1331 = vmatprep.subr.mxu0 0.0
  %1332 = vmatpush1.msra.mxu0 0.0
  %1333 = vmatprep.subr.mxu0 0.0
  %1334 = vmatpush1.msra.mxu0 0.0
  %1335 = vmatprep.subr.mxu0 0.0
  %1336 = vmatpush1.msra.mxu0 0.0
  %1337 = vmatprep.subr.mxu0 0.0
  %1338 = vmatpush1.msra.mxu0 0.0
  %1339 = vmatprep.subr.mxu0 0.0
  %1340 = vmatpush1.msra.mxu0 0.0
  %1341 = vmatprep.subr.mxu0 0.0
  %1342 = vmatpush1.msra.mxu0 0.0
  %1343 = vmatprep.subr.mxu0 0.0
  %1344 = vmatpush1.msra.mxu0 0.0
  %1345 = vmatprep.subr.mxu0 0.0
  %1346 = vmatpush1.msra.mxu0 %v1117
  %1347 = vmatprep.subr.mxu0 0.0
  %1348 = vmatpush1.msra.mxu0 %v1116
  %1349 = vmatprep.subr.mxu0 0.0
  %1350 = vmatpush1.msra.mxu0 %v1115
  %1351 = vmatprep.subr.mxu0 0.0
  %1352 = vmatpush1.msra.mxu0 %v1114
  %1353 = vmatprep.subr.mxu0 0.0
  %1354 = vmatpush2.msra.mxu0 0.0
  %1355 = vmatprep.subr.mxu0 0.0
  %1356 = vmatpush2.msra.mxu0 0.0
  %1357 = vmatprep.subr.mxu0 0.0
  %1358 = vmatpush2.msra.mxu0 0.0
  %1359 = vmatprep.subr.mxu0 0.0
  %1360 = vmatpush2.msra.mxu0 0.0
  %1361 = vmatprep.subr.mxu0 0.0
  %1362 = vmatpush2.msra.mxu0 0.0
  %1363 = vmatprep.subr.mxu0 0.0
  %1364 = vmatpush2.msra.mxu0 0.0
  %1365 = vmatprep.subr.mxu0 0.0
  %1366 = vmatpush2.msra.mxu0 0.0
  %1367 = vmatprep.subr.mxu0 0.0
  %1368 = vmatpush2.msra.mxu0 0.0
  %1369 = vmatprep.subr.mxu0 0.0
  %1370 = vmatpush2.msra.mxu0 0.0
  %1371 = vmatprep.subr.mxu0 0.0
  %1372 = vmatpush2.msra.mxu0 0.0
  %1373 = vmatprep.subr.mxu0 0.0
  %1374 = vmatpush2.msra.mxu0 0.0
  %1375 = vmatprep.subr.mxu0 0.0
  %1376 = vmatpush2.msra.mxu0 0.0
  %1377 = vmatprep.subr.mxu0 0.0
  %1378 = vmatpush2.msra.mxu0 0.0
  %1379 = vmatprep.subr.mxu0 0.0
  %1380 = vmatpush2.msra.mxu0 0.0
  %1381 = vmatprep.subr.mxu0 0.0
  %1382 = vmatpush2.msra.mxu0 0.0
  %1383 = vmatprep.subr.mxu0 0.0
  %1384 = vmatpush2.msra.mxu0 0.0
  %1385 = vmatprep.mubr.f32.mxu0 0.0
  %1386 = vmatmul.mubr.f32.gmra.mxu0 %v1286
  %v1387 = vpop.f32.mrf.mxu0
  %v1388 = vadd.f32 %v1227, %v1387
  %v1389 = vpop.f32.mrf.mxu0
  %1390 = vmatprep.mubr.f32.mxu0 0.0
  %1391 = vmatmul.mubr.f32.gmra.mxu0 %v1289
  %v1392 = vpop.f32.mrf.mxu0
  %v1393 = vadd.f32 %v1232, %v1392
  %v1394 = vpop.f32.mrf.mxu0
  %1395 = vmatprep.mubr.f32.mxu0 0.0
  %1396 = vmatmul.mubr.f32.gmra.mxu0 %v1292
  %v1397 = vpop.f32.mrf.mxu0
  %v1398 = vadd.f32 %v1237, %v1397
  %v1399 = vpop.f32.mrf.mxu0
  %1400 = vmatprep.mubr.f32.mxu0 0.0
  %1401 = vmatmul.mubr.f32.gmra.mxu0 %v1295
  %v1402 = vpop.f32.mrf.mxu0
  %v1403 = vadd.f32 %v1242, %v1402
  %v1404 = vpop.f32.mrf.mxu0
  %1405 = vmatprep.mubr.f32.mxu0 0.0
  %1406 = vmatmul.mubr.f32.gmra.mxu0 %v1298
  %v1407 = vpop.f32.mrf.mxu0
  %v1408 = vadd.f32 %v1247, %v1407
  %v1409 = vpop.f32.mrf.mxu0
  %1410 = vmatprep.mubr.f32.mxu0 0.0
  %1411 = vmatmul.mubr.f32.gmra.mxu0 %v1301
  %v1412 = vpop.f32.mrf.mxu0
  %v1413 = vadd.f32 %v1252, %v1412
  %v1414 = vpop.f32.mrf.mxu0
  %1415 = vmatprep.mubr.f32.mxu0 0.0
  %1416 = vmatmul.mubr.f32.gmra.mxu0 %v1304
  %v1417 = vpop.f32.mrf.mxu0
  %v1418 = vadd.f32 %v1257, %v1417
  %v1419 = vpop.f32.mrf.mxu0
  %1420 = vmatprep.mubr.f32.mxu0 0.0
  %1421 = vmatmul.mubr.f32.gmra.mxu0 %v1307
  %v1422 = vpop.f32.mrf.mxu0
  %v1423 = vadd.f32 %v1262, %v1422
  %v1424 = vpop.f32.mrf.mxu0
  %1425 = vmatprep.mubr.f32.mxu0 0.0
  %1426 = vmatmul.mubr.f32.gmra.mxu0 %v1310
  %v1427 = vpop.f32.mrf.mxu0
  %v1428 = vadd.f32 %v1267, %v1427
  %v1429 = vpop.f32.mrf.mxu0
  %1430 = vmatprep.mubr.f32.mxu0 0.0
  %1431 = vmatmul.mubr.f32.gmra.mxu0 %v1313
  %v1432 = vpop.f32.mrf.mxu0
  %v1433 = vadd.f32 %v1272, %v1432
  %v1434 = vpop.f32.mrf.mxu0
  %1435 = vmatprep.mubr.f32.mxu0 0.0
  %1436 = vmatmul.mubr.f32.gmra.mxu0 %v1316
  %v1437 = vpop.f32.mrf.mxu0
  %v1438 = vadd.f32 %v1277, %v1437
  %v1439 = vpop.f32.mrf.mxu0
  %1440 = vmatprep.mubr.f32.mxu0 0.0
  %1441 = vmatmul.mubr.f32.gmra.mxu0 %v1319
  %v1442 = vpop.f32.mrf.mxu0
  %v1443 = vadd.f32 %v1282, %v1442
  %v1444 = vpop.f32.mrf.mxu0
  %1445 = vdwg.mxu0
  %v1446 = vlaneseq
  %v1447 = vshrl.u32 %v1446, 7
  %v1448 = vsub.s32 5, %v1447
  %v1449 = vrot.slane %v78, %v1448
  %v1450 = vadd.f32 %v1388, %v1449
  %v1451 = vadd.f32 %v1393, %v1449
  %v1452 = vadd.f32 %v1398, %v1449
  %v1453 = vadd.f32 %v1403, %v1449
  %v1454 = vadd.f32 %v1408, %v1449
  %v1455 = vadd.f32 %v1413, %v1449
  %v1456 = vadd.f32 %v1418, %v1449
  %v1457 = vadd.f32 %v1423, %v1449
  %v1458 = vadd.f32 %v1428, %v1449
  %v1459 = vadd.f32 %v1433, %v1449
  %v1460 = vadd.f32 %v1438, %v1449
  %v1461 = vadd.f32 %v1443, %v1449
  %v1462 = vadd.f32 %v937, %v941
  %v1463 = vadd.f32 %v938, %v942
  %v1464 = vadd.f32 %v939, %v943
  %v1465 = vadd.f32 %v940, %v944
  %v1466 = vadd.f32 %v1450, %v1454
  %v1467 = vadd.f32 %v1451, %v1455
  %v1468 = vadd.f32 %v1452, %v1456
  %v1469 = vadd.f32 %v1453, %v1457
  %v1470 = vadd.f32 %v1462, %v945
  %v1471 = vadd.f32 %v1463, %v946
  %v1472 = vadd.f32 %v1464, %v947
  %v1473 = vadd.f32 %v1465, %v948
  %v1474 = vadd.f32 %v1466, %v1458
  %v1475 = vadd.f32 %v1467, %v1459
  %v1476 = vadd.f32 %v1468, %v1460
  %v1477 = vadd.f32 %v1469, %v1461
  %v1478 = vmul.f32 %v1470, 0.33333334
  %v1479 = vmul.f32 %v1471, 0.33333334
  %v1480 = vmul.f32 %v1472, 0.33333334
  %v1481 = vmul.f32 %v1473, 0.33333334
  %v1482 = vmul.f32 %v1474, 0.33333334
  %v1483 = vmul.f32 %v1475, 0.33333334
  %v1484 = vmul.f32 %v1476, 0.33333334
  %v1485 = vmul.f32 %v1477, 0.33333334
  %v1486 = vmax.f32 %v1482, 0.0
  %v1487 = vmax.f32 %v1483, 0.0
  %v1488 = vmax.f32 %v1484, 0.0
  %v1489 = vmax.f32 %v1485, 0.0
  %v1490 = vld [vmem:[%s7] sm:$0xff]
  %v1491 = vld [vmem:[%s7 + $0x8] sm:$0xff]
  %v1492 = vlaneseq
  %v1493 = vshrl.u32 %v1492, 7
  %v1494 = vsub.s32 6, %v1493
  %v1495 = vrot.slane %v78, %v1494
  %vm1496 = vcmask 130048
  %v1498 = vsel %vm1496, %v1486, 0
  %v1501 = vsel %vm1496, %v1487, 0
  %v1504 = vsel %vm1496, %v1488, 0
  %v1507 = vsel %vm1496, %v1489, 0
  %1509 = vmatprep.subr.mxu0 0.0
  %1510 = vmatpush1.msra.mxu0 0.0
  %1511 = vmatprep.subr.mxu0 0.0
  %1512 = vmatpush1.msra.mxu0 0.0
  %1513 = vmatprep.subr.mxu0 0.0
  %1514 = vmatpush1.msra.mxu0 0.0
  %1515 = vmatprep.subr.mxu0 0.0
  %1516 = vmatpush1.msra.mxu0 0.0
  %1517 = vmatprep.subr.mxu0 0.0
  %1518 = vmatpush1.msra.mxu0 0.0
  %1519 = vmatprep.subr.mxu0 0.0
  %1520 = vmatpush1.msra.mxu0 0.0
  %1521 = vmatprep.subr.mxu0 0.0
  %1522 = vmatpush1.msra.mxu0 0.0
  %1523 = vmatprep.subr.mxu0 0.0
  %1524 = vmatpush1.msra.mxu0 0.0
  %1525 = vmatprep.subr.mxu0 0.0
  %1526 = vmatpush1.msra.mxu0 0.0
  %1527 = vmatprep.subr.mxu0 0.0
  %1528 = vmatpush1.msra.mxu0 0.0
  %1529 = vmatprep.subr.mxu0 0.0
  %1530 = vmatpush1.msra.mxu0 0.0
  %1531 = vmatprep.subr.mxu0 0.0
  %1532 = vmatpush1.msra.mxu0 0.0
  %1533 = vmatprep.subr.mxu0 0.0
  %1534 = vmatpush1.msra.mxu0 0.0
  %1535 = vmatprep.subr.mxu0 0.0
  %1536 = vmatpush1.msra.mxu0 0.0
  %1537 = vmatprep.subr.mxu0 0.0
  %1538 = vmatpush1.msra.mxu0 %v1491
  %1539 = vmatprep.subr.mxu0 0.0
  %1540 = vmatpush1.msra.mxu0 %v1490
  %1541 = vmatprep.subr.mxu0 0.0
  %1542 = vmatpush2.msra.mxu0 0.0
  %1543 = vmatprep.subr.mxu0 0.0
  %1544 = vmatpush2.msra.mxu0 0.0
  %1545 = vmatprep.subr.mxu0 0.0
  %1546 = vmatpush2.msra.mxu0 0.0
  %1547 = vmatprep.subr.mxu0 0.0
  %1548 = vmatpush2.msra.mxu0 0.0
  %1549 = vmatprep.subr.mxu0 0.0
  %1550 = vmatpush2.msra.mxu0 0.0
  %1551 = vmatprep.subr.mxu0 0.0
  %1552 = vmatpush2.msra.mxu0 0.0
  %1553 = vmatprep.subr.mxu0 0.0
  %1554 = vmatpush2.msra.mxu0 0.0
  %1555 = vmatprep.subr.mxu0 0.0
  %1556 = vmatpush2.msra.mxu0 0.0
  %1557 = vmatprep.subr.mxu0 0.0
  %1558 = vmatpush2.msra.mxu0 0.0
  %1559 = vmatprep.subr.mxu0 0.0
  %1560 = vmatpush2.msra.mxu0 0.0
  %1561 = vmatprep.subr.mxu0 0.0
  %1562 = vmatpush2.msra.mxu0 0.0
  %1563 = vmatprep.subr.mxu0 0.0
  %1564 = vmatpush2.msra.mxu0 0.0
  %1565 = vmatprep.subr.mxu0 0.0
  %1566 = vmatpush2.msra.mxu0 0.0
  %1567 = vmatprep.subr.mxu0 0.0
  %1568 = vmatpush2.msra.mxu0 0.0
  %1569 = vmatprep.subr.mxu0 0.0
  %1570 = vmatpush2.msra.mxu0 0.0
  %1571 = vmatprep.subr.mxu0 0.0
  %1572 = vmatpush2.msra.mxu0 0.0
  %1573 = vmatprep.mubr.f32.mxu0 0.0
  %1574 = vmatmul.mubr.f32.gmra.mxu0 %v1498
  %v1575 = vpop.f32.mrf.mxu0
  %v1576 = vadd.f32 %v1495, %v1575
  %v1577 = vpop.f32.mrf.mxu0
  %1578 = vmatprep.mubr.f32.mxu0 0.0
  %1579 = vmatmul.mubr.f32.gmra.mxu0 %v1501
  %v1580 = vpop.f32.mrf.mxu0
  %v1581 = vadd.f32 %v1495, %v1580
  %v1582 = vpop.f32.mrf.mxu0
  %1583 = vmatprep.mubr.f32.mxu0 0.0
  %1584 = vmatmul.mubr.f32.gmra.mxu0 %v1504
  %v1585 = vpop.f32.mrf.mxu0
  %v1586 = vadd.f32 %v1495, %v1585
  %v1587 = vpop.f32.mrf.mxu0
  %1588 = vmatprep.mubr.f32.mxu0 0.0
  %1589 = vmatmul.mubr.f32.gmra.mxu0 %v1507
  %v1590 = vpop.f32.mrf.mxu0
  %v1591 = vadd.f32 %v1495, %v1590
  %v1592 = vpop.f32.mrf.mxu0
  %1593 = vdwg.mxu0
  %v1594 = vmax.f32 %v1576, 0.0
  %v1595 = vmax.f32 %v1581, 0.0
  %v1596 = vmax.f32 %v1586, 0.0
  %v1597 = vmax.f32 %v1591, 0.0
  %v1598 = vld [vmem:[%s8] sm:$0xff]
  %v1599 = vld [vmem:[%s8 + $0x8] sm:$0xff]
  %v1600 = vld [vmem:[%s8 + $0x10] sm:$0xff]
  %v1601 = vld [vmem:[%s8 + $0x18] sm:$0xff]
  %v1602 = vld [vmem:[%s9] sm:$0xff]
  %v1603 = vld [vmem:[%s9 + $0x8] sm:$0xff]
  %v1605 = vsel %vm1496, %v1594, 0
  %v1608 = vsel %vm1496, %v1595, 0
  %v1611 = vsel %vm1496, %v1596, 0
  %v1614 = vsel %vm1496, %v1597, 0
  %1616 = vmatprep.subr.mxu0 0.0
  %1617 = vmatpush1.msra.mxu0 0.0
  %1618 = vmatprep.subr.mxu0 0.0
  %1619 = vmatpush1.msra.mxu0 0.0
  %1620 = vmatprep.subr.mxu0 0.0
  %1621 = vmatpush1.msra.mxu0 0.0
  %1622 = vmatprep.subr.mxu0 0.0
  %1623 = vmatpush1.msra.mxu0 0.0
  %1624 = vmatprep.subr.mxu0 0.0
  %1625 = vmatpush1.msra.mxu0 0.0
  %1626 = vmatprep.subr.mxu0 0.0
  %1627 = vmatpush1.msra.mxu0 0.0
  %1628 = vmatprep.subr.mxu0 0.0
  %1629 = vmatpush1.msra.mxu0 0.0
  %1630 = vmatprep.subr.mxu0 0.0
  %1631 = vmatpush1.msra.mxu0 0.0
  %1632 = vmatprep.subr.mxu0 0.0
  %1633 = vmatpush1.msra.mxu0 0.0
  %1634 = vmatprep.subr.mxu0 0.0
  %1635 = vmatpush1.msra.mxu0 0.0
  %1636 = vmatprep.subr.mxu0 0.0
  %1637 = vmatpush1.msra.mxu0 0.0
  %1638 = vmatprep.subr.mxu0 0.0
  %1639 = vmatpush1.msra.mxu0 0.0
  %1640 = vmatprep.subr.mxu0 0.0
  %1641 = vmatpush1.msra.mxu0 0.0
  %1642 = vmatprep.subr.mxu0 0.0
  %1643 = vmatpush1.msra.mxu0 0.0
  %1644 = vmatprep.subr.mxu0 0.0
  %1645 = vmatpush1.msra.mxu0 %v1603
  %1646 = vmatprep.subr.mxu0 0.0
  %1647 = vmatpush1.msra.mxu0 %v1602
  %1648 = vmatprep.subr.mxu0 0.0
  %1649 = vmatpush2.msra.mxu0 0.0
  %1650 = vmatprep.subr.mxu0 0.0
  %1651 = vmatpush2.msra.mxu0 0.0
  %1652 = vmatprep.subr.mxu0 0.0
  %1653 = vmatpush2.msra.mxu0 0.0
  %1654 = vmatprep.subr.mxu0 0.0
  %1655 = vmatpush2.msra.mxu0 0.0
  %1656 = vmatprep.subr.mxu0 0.0
  %1657 = vmatpush2.msra.mxu0 0.0
  %1658 = vmatprep.subr.mxu0 0.0
  %1659 = vmatpush2.msra.mxu0 0.0
  %1660 = vmatprep.subr.mxu0 0.0
  %1661 = vmatpush2.msra.mxu0 0.0
  %1662 = vmatprep.subr.mxu0 0.0
  %1663 = vmatpush2.msra.mxu0 0.0
  %1664 = vmatprep.subr.mxu0 0.0
  %1665 = vmatpush2.msra.mxu0 0.0
  %1666 = vmatprep.subr.mxu0 0.0
  %1667 = vmatpush2.msra.mxu0 0.0
  %1668 = vmatprep.subr.mxu0 0.0
  %1669 = vmatpush2.msra.mxu0 0.0
  %1670 = vmatprep.subr.mxu0 0.0
  %1671 = vmatpush2.msra.mxu0 0.0
  %1672 = vmatprep.subr.mxu0 0.0
  %1673 = vmatpush2.msra.mxu0 0.0
  %1674 = vmatprep.subr.mxu0 0.0
  %1675 = vmatpush2.msra.mxu0 0.0
  %1676 = vmatprep.subr.mxu0 0.0
  %1677 = vmatpush2.msra.mxu0 0.0
  %1678 = vmatprep.subr.mxu0 0.0
  %1679 = vmatpush2.msra.mxu0 0.0
  %1680 = vmatprep.mubr.f32.mxu0 0.0
  %1681 = vmatmul.mubr.f32.gmra.mxu0 %v1605
  %v1682 = vpop.f32.mrf.mxu0
  %v1683 = vadd.f32 0.0, %v1682
  %v1684 = vpop.f32.mrf.mxu0
  %1685 = vmatprep.mubr.f32.mxu0 0.0
  %1686 = vmatmul.mubr.f32.gmra.mxu0 %v1608
  %v1687 = vpop.f32.mrf.mxu0
  %v1688 = vadd.f32 0.0, %v1687
  %v1689 = vpop.f32.mrf.mxu0
  %1690 = vmatprep.mubr.f32.mxu0 0.0
  %1691 = vmatmul.mubr.f32.gmra.mxu0 %v1611
  %v1692 = vpop.f32.mrf.mxu0
  %v1693 = vadd.f32 0.0, %v1692
  %v1694 = vpop.f32.mrf.mxu0
  %1695 = vmatprep.mubr.f32.mxu0 0.0
  %1696 = vmatmul.mubr.f32.gmra.mxu0 %v1614
  %v1697 = vpop.f32.mrf.mxu0
  %v1698 = vadd.f32 0.0, %v1697
  %v1699 = vpop.f32.mrf.mxu0
  %1700 = vdwg.mxu0
  %v1702 = vsel %vm273, %v1478, 0
  %v1705 = vsel %vm273, %v1479, 0
  %v1708 = vsel %vm273, %v1480, 0
  %v1711 = vsel %vm273, %v1481, 0
  %1713 = vmatprep.subr.mxu0 0.0
  %1714 = vmatpush1.msra.mxu0 0.0
  %1715 = vmatprep.subr.mxu0 0.0
  %1716 = vmatpush1.msra.mxu0 0.0
  %1717 = vmatprep.subr.mxu0 0.0
  %1718 = vmatpush1.msra.mxu0 0.0
  %1719 = vmatprep.subr.mxu0 0.0
  %1720 = vmatpush1.msra.mxu0 0.0
  %1721 = vmatprep.subr.mxu0 0.0
  %1722 = vmatpush1.msra.mxu0 0.0
  %1723 = vmatprep.subr.mxu0 0.0
  %1724 = vmatpush1.msra.mxu0 0.0
  %1725 = vmatprep.subr.mxu0 0.0
  %1726 = vmatpush1.msra.mxu0 0.0
  %1727 = vmatprep.subr.mxu0 0.0
  %1728 = vmatpush1.msra.mxu0 0.0
  %1729 = vmatprep.subr.mxu0 0.0
  %1730 = vmatpush1.msra.mxu0 0.0
  %1731 = vmatprep.subr.mxu0 0.0
  %1732 = vmatpush1.msra.mxu0 0.0
  %1733 = vmatprep.subr.mxu0 0.0
  %1734 = vmatpush1.msra.mxu0 0.0
  %1735 = vmatprep.subr.mxu0 0.0
  %1736 = vmatpush1.msra.mxu0 0.0
  %1737 = vmatprep.subr.mxu0 0.0
  %1738 = vmatpush1.msra.mxu0 %v1601
  %1739 = vmatprep.subr.mxu0 0.0
  %1740 = vmatpush1.msra.mxu0 %v1600
  %1741 = vmatprep.subr.mxu0 0.0
  %1742 = vmatpush1.msra.mxu0 %v1599
  %1743 = vmatprep.subr.mxu0 0.0
  %1744 = vmatpush1.msra.mxu0 %v1598
  %1745 = vmatprep.subr.mxu0 0.0
  %1746 = vmatpush2.msra.mxu0 0.0
  %1747 = vmatprep.subr.mxu0 0.0
  %1748 = vmatpush2.msra.mxu0 0.0
  %1749 = vmatprep.subr.mxu0 0.0
  %1750 = vmatpush2.msra.mxu0 0.0
  %1751 = vmatprep.subr.mxu0 0.0
  %1752 = vmatpush2.msra.mxu0 0.0
  %1753 = vmatprep.subr.mxu0 0.0
  %1754 = vmatpush2.msra.mxu0 0.0
  %1755 = vmatprep.subr.mxu0 0.0
  %1756 = vmatpush2.msra.mxu0 0.0
  %1757 = vmatprep.subr.mxu0 0.0
  %1758 = vmatpush2.msra.mxu0 0.0
  %1759 = vmatprep.subr.mxu0 0.0
  %1760 = vmatpush2.msra.mxu0 0.0
  %1761 = vmatprep.subr.mxu0 0.0
  %1762 = vmatpush2.msra.mxu0 0.0
  %1763 = vmatprep.subr.mxu0 0.0
  %1764 = vmatpush2.msra.mxu0 0.0
  %1765 = vmatprep.subr.mxu0 0.0
  %1766 = vmatpush2.msra.mxu0 0.0
  %1767 = vmatprep.subr.mxu0 0.0
  %1768 = vmatpush2.msra.mxu0 0.0
  %1769 = vmatprep.subr.mxu0 0.0
  %1770 = vmatpush2.msra.mxu0 0.0
  %1771 = vmatprep.subr.mxu0 0.0
  %1772 = vmatpush2.msra.mxu0 0.0
  %1773 = vmatprep.subr.mxu0 0.0
  %1774 = vmatpush2.msra.mxu0 0.0
  %1775 = vmatprep.subr.mxu0 0.0
  %1776 = vmatpush2.msra.mxu0 0.0
  %1777 = vmatprep.mubr.f32.mxu0 0.0
  %1778 = vmatmul.mubr.f32.gmra.mxu0 %v1702
  %v1779 = vpop.f32.mrf.mxu0
  %v1780 = vadd.f32 %v1683, %v1779
  %v1781 = vpop.f32.mrf.mxu0
  %1782 = vmatprep.mubr.f32.mxu0 0.0
  %1783 = vmatmul.mubr.f32.gmra.mxu0 %v1705
  %v1784 = vpop.f32.mrf.mxu0
  %v1785 = vadd.f32 %v1688, %v1784
  %v1786 = vpop.f32.mrf.mxu0
  %1787 = vmatprep.mubr.f32.mxu0 0.0
  %1788 = vmatmul.mubr.f32.gmra.mxu0 %v1708
  %v1789 = vpop.f32.mrf.mxu0
  %v1790 = vadd.f32 %v1693, %v1789
  %v1791 = vpop.f32.mrf.mxu0
  %1792 = vmatprep.mubr.f32.mxu0 0.0
  %1793 = vmatmul.mubr.f32.gmra.mxu0 %v1711
  %v1794 = vpop.f32.mrf.mxu0
  %v1795 = vadd.f32 %v1698, %v1794
  %v1796 = vpop.f32.mrf.mxu0
  %1797 = vdwg.mxu0
  %v1798 = vlaneseq
  %v1799 = vshrl.u32 %v1798, 7
  %v1800 = vsub.s32 7, %v1799
  %v1801 = vrot.slane %v78, %v1800
  %v1802 = vadd.f32 %v1780, %v1801
  %v1803 = vadd.f32 %v1785, %v1801
  %v1804 = vadd.f32 %v1790, %v1801
  %v1805 = vadd.f32 %v1795, %v1801
  %vm1806 = vcmask 31744
  %1807 = vst.msk [vmem:[%s11] sm:$0xff] %vm1806, %v1802
  %1808 = vst.msk [vmem:[%s11 + $0x8] sm:$0xff] %vm1806, %v1803
  %1809 = vst.msk [vmem:[%s11 + $0x10] sm:$0xff] %vm1806, %v1804
  %1810 = vst.msk [vmem:[%s11 + $0x18] sm:$0xff] %vm1806, %v1805
  // Predicated region
  $region46: #{tpu_custom_call.1} parent=0 // pred_check
    _
  $region47: #{tpu_custom_call.1} parent=0 // pred_check_branch
    %1812 = sbr.rel (0) target = $region49
  $region48: #{tpu_custom_call.1} parent=0 // pred_region
    _
  $region49: #{tpu_custom_call.1} parent=0 // pred_fallthru
    _
  // Predicated region
  $region50: #{tpu_custom_call.1} parent=0 // pred_check
    _
  $region51: #{tpu_custom_call.1} parent=0 // pred_check_branch
    %1814 = sbr.rel (0) target = $region53
  $region52: #{tpu_custom_call.1} parent=0 // pred_region
    _
  $region53: #{tpu_custom_call.1} parent=0 // pred_fallthru
    _

</llo_original>
